<compile_context>
chip_gen: v6e
topology: v6e:2x2x1
jax: 0.10.0
libtpu: 0.0.40
codegen_flags: <defaults>
</compile_context>

<pallas_src>
import functools
import math

import jax
import jax.numpy as jnp
from jax import lax
from jax.experimental import pallas as pl
from jax.experimental.pallas import tpu as pltpu


# -----------------------------------------------------------------------------
# Deterministic parameter initialization (mirrors _reset_parameters, rank 0 / ws 1)
# -----------------------------------------------------------------------------
def init_params(key, embed_dim, ndim):
    k_alpha, k_delta, k_perm, k_gamma, k_omega = jax.random.split(key, 5)
    alpha = 0.2 * jax.random.normal(k_alpha, (embed_dim, ndim, 1), jnp.float32)
    delta = 0.2 * jax.random.normal(k_delta, (embed_dim, ndim, 1), jnp.float32)
    idx = jax.random.permutation(k_perm, embed_dim)
    f = math.log(embed_dim) / embed_dim
    freqs = jnp.exp(jnp.arange(1, embed_dim + 1, dtype=jnp.float32) * -f)
    freqs = freqs[idx].reshape(embed_dim, 1, 1)
    theta = jnp.log(freqs / (1.0 - freqs))
    gamma = jax.random.normal(k_gamma, (embed_dim, ndim, 2), jnp.float32)
    gamma = gamma.at[:, :, 1].set(0.0)
    omega = 0.25 * jax.random.truncated_normal(
        k_omega, -4.0, 4.0, (embed_dim, 1), jnp.float32)
    return dict(alpha=alpha, delta=delta, theta=theta, gamma=gamma, omega=omega)


# -----------------------------------------------------------------------------
# _calc_coeffs (plain JAX glue: tiny elementwise parameter transform)
# -----------------------------------------------------------------------------
def calc_coeffs(params):
    alpha_p = params["alpha"].astype(jnp.float32)   # (D, N, 1)
    delta_p = params["delta"].astype(jnp.float32)   # (D, N, 1)
    theta_p = params["theta"].astype(jnp.float32)   # (D, 1, 1)
    gamma_p = params["gamma"].astype(jnp.float32)   # (D, N, 2)
    D, N, _ = alpha_p.shape
    scale = math.sqrt(1.0 / N)

    theta = jax.nn.sigmoid(theta_p) * (2.0 * math.pi / N)          # (D, 1, 1)
    wavelets = jnp.arange(1, N + 1, dtype=jnp.float32).reshape(1, N, 1)
    theta = wavelets * theta                                       # (D, N, 1)
    alpha = jax.nn.sigmoid(alpha_p)
    delta = jax.nn.sigmoid(delta_p)

    p = alpha[..., 0]                                              # (D, N)
    mag = (1.0 - alpha * delta)[..., 0]                            # (D, N)
    q_re = mag * jnp.cos(theta[..., 0])                            # (D, N)
    q_im = mag * jnp.sin(theta[..., 0])                            # (D, N)
    g_re = gamma_p[..., 0] * scale                                 # (D, N)
    g_im = gamma_p[..., 1] * scale                                 # (D, N)
    return p, q_re, q_im, g_re, g_im


# -----------------------------------------------------------------------------
# Pallas kernel: complex EMA recurrence over one (channel-tile, batch, time-chunk)
# -----------------------------------------------------------------------------
def _ema_kernel(x_ref, p_ref, qre_ref, qim_ref, are_ref, aim_ref, cps_ref,
                hre_ref, him_ref, *refs, last_state: bool, mb: int):
    if last_state:
        out_ref, hro_ref, hio_ref, ur_ref, ui_ref = refs
    else:
        out_ref, ur_ref, ui_ref = refs

    # Initialize the carried EMA state from hx at the first time chunk.
    @pl.when(pl.program_id(2) == 0)
    def _():
        ur_ref[...] = hre_ref[0]
        ui_ref[...] = him_ref[0]

    p = p_ref[...]          # (N, tD)
    qre = qre_ref[...]      # (N, tD)
    qim = qim_ref[...]      # (N, tD)
    are = are_ref[...]      # (N, tD)  Re(gamma * q)
    aim = aim_ref[...]      # (N, tD)  Im(gamma * q)
    cps = cps_ref[...]      # (1, tD)  sum_n gamma_re * p + omega
    n_dim, t_d = p.shape
    l_c = x_ref.shape[1]

    def step(t, ur, ui):
        xr = x_ref[0, pl.ds(t, 1), :]                      # (1, tD) row of x
        xb = jnp.broadcast_to(xr, (n_dim, t_d))            # (N, tD)
        # y_t depends only on the PREVIOUS state -> off the serial carry chain:
        #   y_t = sum_n [Re(gamma q) ur - Im(gamma q) ui] + cps * x_t
        w = are * ur - aim * ui
        out_ref[0, pl.ds(t, 1), :] = jnp.sum(w, axis=0, keepdims=True) + cps * xr
        # state update: u_t = p x_t + q u_{t-1}
        nr = p * xb + (qre * ur - qim * ui)
        ni = qre * ui + qim * ur
        return nr, ni

    n_blocks = l_c // mb
    ur, ui = ur_ref[...], ui_ref[...]

    if n_blocks > 0:
        def mb_body(i, carry):
            ur, ui = carry
            t0 = pl.multiple_of(i * mb, mb)
            for j in range(mb):          # static unroll of mb time steps
                ur, ui = step(t0 + j, ur, ui)
            return ur, ui
        ur, ui = lax.fori_loop(0, n_blocks, mb_body, (ur, ui))

    for j in range(n_blocks * mb, l_c):  # static tail when Lc % mb != 0
        ur, ui = step(j, ur, ui)

    # Carry state to the next time chunk.
    ur_ref[...] = ur
    ui_ref[...] = ui

    if last_state:
        @pl.when(pl.program_id(2) == pl.num_programs(2) - 1)
        def _():
            hro_ref[0] = ur
            hio_ref[0] = ui


# -----------------------------------------------------------------------------
# Forward wrapper (matches MultiHeadComplexEMA.forward(x, hx, compute_last_state))
# -----------------------------------------------------------------------------
@functools.partial(jax.jit, static_argnames=("compute_last_state", "time_chunk"))
def multihead_complex_ema_forward(x, hx, params, *, compute_last_state, time_chunk=None):
    # x: (B, D, L) float; hx: optional complex (B, D, N)
    B, D, L = x.shape
    N = params["alpha"].shape[1]

    p, q_re, q_im, g_re, g_im = calc_coeffs(params)        # (D, N) each
    omega = params["omega"].astype(jnp.float32)            # (D, 1)

    # Output-side coefficients:
    #   a = gamma * q   (applied to the previous state)
    #   cps = sum_n gamma_re * p + omega  (direct + residual term, one row per channel)
    a_re = g_re * q_re - g_im * q_im
    a_im = g_re * q_im + g_im * q_re
    cps = jnp.sum(g_re * p, axis=1, keepdims=True) + omega  # (D, 1)

    # Pad channels to a multiple of 128 lanes; pick a 256-lane tile when worthwhile.
    Dp = ((D + 127) // 128) * 128
    tD = 256 if (Dp % 256 == 0 and (Dp // 256) * B >= 2) else 128
    pad_d = Dp - D

    def prep_coef(c):                                       # (D, N) -> (N, Dp)
        c = jnp.transpose(c.astype(jnp.float32), (1, 0))
        return jnp.pad(c, ((0, 0), (0, pad_d)))

    pT, qreT, qimT, areT, aimT = map(prep_coef, (p, q_re, q_im, a_re, a_im))
    cpsT = jnp.pad(jnp.transpose(cps, (1, 0)), ((0, 0), (0, pad_d)))   # (1, Dp)

    # Kernel operates on (B, L, D): time on sublanes, channels on lanes.
    # TODO(synk): these wrapper transposes are extra HBM passes; remove by keeping the
    #             model in (B, L, D) layout or transposing per chunk inside the kernel.
    xk = jnp.transpose(x, (0, 2, 1)).astype(jnp.float32)    # (B, L, D)
    xk = jnp.pad(xk, ((0, 0), (0, 0), (0, pad_d)))          # (B, L, Dp)

    if hx is None:
        h_re = jnp.zeros((B, N, Dp), jnp.float32)
        h_im = jnp.zeros((B, N, Dp), jnp.float32)
    else:
        h_re = jnp.pad(jnp.transpose(jnp.real(hx), (0, 2, 1)).astype(jnp.float32),
                       ((0, 0), (0, 0), (0, pad_d)))
        h_im = jnp.pad(jnp.transpose(jnp.imag(hx), (0, 2, 1)).astype(jnp.float32),
                       ((0, 0), (0, 0), (0, pad_d)))

    # Time-chunk size: largest "nice" chunk dividing L (bounds VMEM independent of L).
    if time_chunk is None:
        Lc = L
        for cand in (512, 256, 128, 64, 32, 16, 8):
            if L % cand == 0:
                Lc = cand
                break
    else:
        Lc = time_chunk
    assert L % Lc == 0 and (Lc == L or Lc % 8 == 0), (L, Lc)

    mb = 8                                   # statically-unrolled micro-block length
    grid = (Dp // tD, B, L // Lc)            # coeff tiles depend only on d (slowest axis)

    x_spec = pl.BlockSpec((1, Lc, tD), lambda d, b, c: (b, c, d))
    coef_spec = pl.BlockSpec((N, tD), lambda d, b, c: (0, d))
    cps_spec = pl.BlockSpec((1, tD), lambda d, b, c: (0, d))
    state_spec = pl.BlockSpec((1, N, tD), lambda d, b, c: (b, 0, d))

    out_shape = [jax.ShapeDtypeStruct((B, L, Dp), jnp.float32)]
    out_specs = [x_spec]
    if compute_last_state:
        out_shape += [jax.ShapeDtypeStruct((B, N, Dp), jnp.float32)] * 2
        out_specs += [state_spec, state_spec]

    kernel = functools.partial(_ema_kernel,
                               last_state=bool(compute_last_state), mb=mb)

    res = pl.pallas_call(
        kernel,
        grid=grid,
        in_specs=[x_spec] + [coef_spec] * 5 + [cps_spec, state_spec, state_spec],
        out_specs=out_specs,
        out_shape=out_shape,
        scratch_shapes=[pltpu.VMEM((N, tD), jnp.float32),
                        pltpu.VMEM((N, tD), jnp.float32)],
        compiler_params=pltpu.CompilerParams(
            dimension_semantics=("parallel", "parallel", "arbitrary")),
    )(xk, pT, qreT, qimT, areT, aimT, cpsT, h_re, h_im)

    out_pad = res[0]
    output = jnp.transpose(out_pad[:, :, :D], (0, 2, 1)).astype(x.dtype)  # (B, D, L)

    h = None
    if compute_last_state:
        hro, hio = res[1], res[2]
        h = (jnp.transpose(hro[:, :, :D], (0, 2, 1))
             + 1j * jnp.transpose(hio[:, :, :D], (0, 2, 1))).astype(jnp.complex64)
    return output, h


# -----------------------------------------------------------------------------
# Pure-JAX reference (lax.scan over the same recurrence) for verification
# -----------------------------------------------------------------------------
def ref_forward(x, hx, params):
    p, q_re, q_im, g_re, g_im = calc_coeffs(params)
    omega = params["omega"].astype(jnp.float32)
    q = (q_re + 1j * q_im).astype(jnp.complex64)
    g = (g_re + 1j * g_im).astype(jnp.complex64)
    B, D, L = x.shape
    u0 = jnp.zeros((B, D, p.shape[1]), jnp.complex64) if hx is None \
        else hx.astype(jnp.complex64)
    xs = jnp.moveaxis(x.astype(jnp.float32), -1, 0)            # (L, B, D)

    def step(u, xt):
        u_new = p[None] * xt[..., None] + q[None] * u
        y = jnp.sum(jnp.real(g[None] * u_new), axis=-1)
        return u_new, y

    u_last, ys = lax.scan(step, u0, xs)
    out = jnp.moveaxis(ys, 0, -1) + x.astype(jnp.float32) * omega[None]
    return out.astype(x.dtype), u_last


if __name__ == "__main__":
    B, D, N, L = 2, 32, 16, 16
    key = jax.random.PRNGKey(0)
    kp, kx, kh1, kh2 = jax.random.split(key, 4)
    params = init_params(kp, D, N)
    x = jax.random.normal(kx, (B, D, L), jnp.float32)

    # 1) No initial state, compute the last hidden state.
    out, h = multihead_complex_ema_forward(x, None, params, compute_last_state=True)
    out, h = jax.block_until_ready((out, h))
    ref_out, ref_h = ref_forward(x, None, params)
    assert out.shape == (B, D, L), out.shape
    assert h.shape == (B, D, N), h.shape
    assert jnp.allclose(out, ref_out, atol=1e-4, rtol=1e-4), "output mismatch"
    assert jnp.allclose(h, ref_h, atol=1e-4, rtol=1e-4), "hidden state mismatch"

    # 2) With an initial state, multiple time chunks (scratch state carry),
    #    and compute_last_state=False (state outputs dropped).
    hx = 0.1 * (jax.random.normal(kh1, (B, D, N), jnp.float32)
                + 1j * jax.random.normal(kh2, (B, D, N), jnp.float32))
    hx = hx.astype(jnp.complex64)
    out2, h2 = multihead_complex_ema_forward(
        x, hx, params, compute_last_state=False, time_chunk=8)
    out2 = jax.block_until_ready(out2)
    ref_out2, _ = ref_forward(x, hx, params)
    assert h2 is None
    assert out2.shape == (B, D, L), out2.shape
    assert jnp.allclose(out2, ref_out2, atol=1e-4, rtol=1e-4), "output mismatch (hx)"

    print("KERNEL_OK")
</pallas_src>

<mosaic_0001>
module attributes {stable_mosaic.version = 11 : i64} {
  func.func @_ema_kernel(%arg0: i32, %arg1: i32, %arg2: i32, %arg3: memref<1x16x128xf32, #tpu.memory_space<vmem>>, %arg4: memref<16x128xf32, #tpu.memory_space<vmem>>, %arg5: memref<16x128xf32, #tpu.memory_space<vmem>>, %arg6: memref<16x128xf32, #tpu.memory_space<vmem>>, %arg7: memref<16x128xf32, #tpu.memory_space<vmem>>, %arg8: memref<16x128xf32, #tpu.memory_space<vmem>>, %arg9: memref<1x128xf32, #tpu.memory_space<vmem>>, %arg10: memref<1x16x128xf32, #tpu.memory_space<vmem>>, %arg11: memref<1x16x128xf32, #tpu.memory_space<vmem>>, %arg12: memref<1x16x128xf32, #tpu.memory_space<vmem>>, %arg13: memref<1x16x128xf32, #tpu.memory_space<vmem>>, %arg14: memref<1x16x128xf32, #tpu.memory_space<vmem>>, %arg15: memref<16x128xf32, #tpu.memory_space<vmem>>, %arg16: memref<16x128xf32, #tpu.memory_space<vmem>>) attributes {dimension_semantics = [#tpu.dimension_semantics<parallel>, #tpu.dimension_semantics<parallel>, #tpu.dimension_semantics<arbitrary>], iteration_bounds = array<i64: 1, 2, 1>, scalar_prefetch = 0 : i64, scratch_operands = 2 : i64, tpu.core_type = #tpu.core_type<tc>, window_params = [{transform_indices = @transform_0, window_bounds = array<i64: 1, 16, 128>}, {transform_indices = @transform_1, window_bounds = array<i64: 16, 128>}, {transform_indices = @transform_2, window_bounds = array<i64: 16, 128>}, {transform_indices = @transform_3, window_bounds = array<i64: 16, 128>}, {transform_indices = @transform_4, window_bounds = array<i64: 16, 128>}, {transform_indices = @transform_5, window_bounds = array<i64: 16, 128>}, {transform_indices = @transform_6, window_bounds = array<i64: 1, 128>}, {transform_indices = @transform_7, window_bounds = array<i64: 1, 16, 128>}, {transform_indices = @transform_8, window_bounds = array<i64: 1, 16, 128>}, {transform_indices = @transform_9, window_bounds = array<i64: 1, 16, 128>}, {transform_indices = @transform_10, window_bounds = array<i64: 1, 16, 128>}, {transform_indices = @transform_11, window_bounds = array<i64: 1, 16, 128>}]} {
    %c0_i32 = arith.constant 0 : i32
    %0 = arith.cmpi eq, %arg2, %c0_i32 : i32
    %1 = arith.extui %0 : i1 to i32
    %c0_i32_0 = arith.constant 0 : i32
    %2 = arith.cmpi ne, %1, %c0_i32_0 : i32
    scf.if %2 {
      %c0_24 = arith.constant 0 : index
      %c0_25 = arith.constant 0 : index
      %c0_26 = arith.constant 0 : index
      %18 = vector.load %arg10[%c0_24, %c0_25, %c0_26] : memref<1x16x128xf32, #tpu.memory_space<vmem>>, vector<1x16x128xf32>
      %19 = vector.shape_cast %18 : vector<1x16x128xf32> to vector<16x128xf32>
      %c0_27 = arith.constant 0 : index
      %c0_28 = arith.constant 0 : index
      %20 = vector.load %arg15[%c0_27, %c0_28] : memref<16x128xf32, #tpu.memory_space<vmem>>, vector<16x128xf32>
      tpu.vector_store %arg15[%c0_27, %c0_28], %19 {strides = array<i32>} : memref<16x128xf32, #tpu.memory_space<vmem>>, vector<16x128xf32>,
      %c0_29 = arith.constant 0 : index
      %c0_30 = arith.constant 0 : index
      %c0_31 = arith.constant 0 : index
      %21 = vector.load %arg11[%c0_29, %c0_30, %c0_31] : memref<1x16x128xf32, #tpu.memory_space<vmem>>, vector<1x16x128xf32>
      %22 = vector.shape_cast %21 : vector<1x16x128xf32> to vector<16x128xf32>
      %c0_32 = arith.constant 0 : index
      %c0_33 = arith.constant 0 : index
      %23 = vector.load %arg16[%c0_32, %c0_33] : memref<16x128xf32, #tpu.memory_space<vmem>>, vector<16x128xf32>
      tpu.vector_store %arg16[%c0_32, %c0_33], %22 {strides = array<i32>} : memref<16x128xf32, #tpu.memory_space<vmem>>, vector<16x128xf32>,
    } else {
    }
    %c0 = arith.constant 0 : index
    %c0_1 = arith.constant 0 : index
    %3 = vector.load %arg4[%c0, %c0_1] : memref<16x128xf32, #tpu.memory_space<vmem>>, vector<16x128xf32>
    %c0_2 = arith.constant 0 : index
    %c0_3 = arith.constant 0 : index
    %4 = vector.load %arg5[%c0_2, %c0_3] : memref<16x128xf32, #tpu.memory_space<vmem>>, vector<16x128xf32>
    %c0_4 = arith.constant 0 : index
    %c0_5 = arith.constant 0 : index
    %5 = vector.load %arg6[%c0_4, %c0_5] : memref<16x128xf32, #tpu.memory_space<vmem>>, vector<16x128xf32>
    %c0_6 = arith.constant 0 : index
    %c0_7 = arith.constant 0 : index
    %6 = vector.load %arg7[%c0_6, %c0_7] : memref<16x128xf32, #tpu.memory_space<vmem>>, vector<16x128xf32>
    %c0_8 = arith.constant 0 : index
    %c0_9 = arith.constant 0 : index
    %7 = vector.load %arg8[%c0_8, %c0_9] : memref<16x128xf32, #tpu.memory_space<vmem>>, vector<16x128xf32>
    %c0_10 = arith.constant 0 : index
    %c0_11 = arith.constant 0 : index
    %8 = vector.load %arg9[%c0_10, %c0_11] : memref<1x128xf32, #tpu.memory_space<vmem>>, vector<1x128xf32>
    %c0_12 = arith.constant 0 : index
    %c0_13 = arith.constant 0 : index
    %9 = vector.load %arg15[%c0_12, %c0_13] : memref<16x128xf32, #tpu.memory_space<vmem>>, vector<16x128xf32>
    %c0_14 = arith.constant 0 : index
    %c0_15 = arith.constant 0 : index
    %10 = vector.load %arg16[%c0_14, %c0_15] : memref<16x128xf32, #tpu.memory_space<vmem>>, vector<16x128xf32>
    %c0_i32_16 = arith.constant 0 : i32
    %c2_i32 = arith.constant 2 : i32
    %11 = arith.addi %c0_i32_16, %c2_i32 : i32
    %c1_i32 = arith.constant 1 : i32
    %12:2 = scf.for %arg17 = %c0_i32_16 to %11 step %c1_i32 iter_args(%arg18 = %9, %arg19 = %10) -> (vector<16x128xf32>, vector<16x128xf32>)  : i32 {
      %c8_i32 = arith.constant 8 : i32
      %18 = arith.muli %arg17, %c8_i32 : i32
      %19 = tpu.assume_multiple %18, 8 : i32
      %c0_i32_24 = arith.constant 0 : i32
      %20 = arith.addi %19, %c0_i32_24 : i32
      %c0_25 = arith.constant 0 : index
      %21 = arith.index_cast %20 : i32 to index
      %c0_26 = arith.constant 0 : index
      %22 = vector.load %arg3[%c0_25, %21, %c0_26] : memref<1x16x128xf32, #tpu.memory_space<vmem>>, vector<1x1x128xf32>
      %23 = vector.shape_cast %22 : vector<1x1x128xf32> to vector<1x128xf32>
      %24 = vector.shape_cast %23 : vector<1x128xf32> to vector<1x128xf32>
      %25 = vector.broadcast %24 : vector<1x128xf32> to vector<16x128xf32>
      %26 = arith.mulf %6, %arg18 : vector<16x128xf32>
      %27 = arith.mulf %7, %arg19 : vector<16x128xf32>
      %28 = arith.subf %26, %27 : vector<16x128xf32>
      %cst = arith.constant dense<0.000000e+00> : vector<128xf32>
      %29 = vector.multi_reduction <add>, %28, %cst [0] : vector<16x128xf32> to vector<128xf32>
      %30 = vector.shape_cast %29 : vector<128xf32> to vector<1x128xf32>
      %31 = arith.mulf %8, %23 : vector<1x128xf32>
      %32 = arith.addf %30, %31 : vector<1x128xf32>
      %c0_27 = arith.constant 0 : index
      %33 = arith.index_cast %20 : i32 to index
      %c0_28 = arith.constant 0 : index
      %34 = vector.load %arg12[%c0_27, %33, %c0_28] : memref<1x16x128xf32, #tpu.memory_space<vmem>>, vector<1x1x128xf32>
      %35 = vector.shape_cast %34 : vector<1x1x128xf32> to vector<1x128xf32>
      %36 = vector.shape_cast %32 : vector<1x128xf32> to vector<1x1x128xf32>
      tpu.vector_store %arg12[%c0_27, %33, %c0_28], %36 {strides = array<i32>} : memref<1x16x128xf32, #tpu.memory_space<vmem>>, vector<1x1x128xf32>,
      %37 = arith.mulf %3, %25 : vector<16x128xf32>
      %38 = arith.mulf %4, %arg18 : vector<16x128xf32>
      %39 = arith.mulf %5, %arg19 : vector<16x128xf32>
      %40 = arith.subf %38, %39 : vector<16x128xf32>
      %41 = arith.addf %37, %40 : vector<16x128xf32>
      %42 = arith.mulf %4, %arg19 : vector<16x128xf32>
      %43 = arith.mulf %5, %arg18 : vector<16x128xf32>
      %44 = arith.addf %42, %43 : vector<16x128xf32>
      %c1_i32_29 = arith.constant 1 : i32
      %45 = arith.addi %19, %c1_i32_29 : i32
      %c0_30 = arith.constant 0 : index
      %46 = arith.index_cast %45 : i32 to index
      %c0_31 = arith.constant 0 : index
      %47 = vector.load %arg3[%c0_30, %46, %c0_31] : memref<1x16x128xf32, #tpu.memory_space<vmem>>, vector<1x1x128xf32>
      %48 = vector.shape_cast %47 : vector<1x1x128xf32> to vector<1x128xf32>
      %49 = vector.shape_cast %48 : vector<1x128xf32> to vector<1x128xf32>
      %50 = vector.broadcast %49 : vector<1x128xf32> to vector<16x128xf32>
      %51 = arith.mulf %6, %41 : vector<16x128xf32>
      %52 = arith.mulf %7, %44 : vector<16x128xf32>
      %53 = arith.subf %51, %52 : vector<16x128xf32>
      %cst_32 = arith.constant dense<0.000000e+00> : vector<128xf32>
      %54 = vector.multi_reduction <add>, %53, %cst_32 [0] : vector<16x128xf32> to vector<128xf32>
      %55 = vector.shape_cast %54 : vector<128xf32> to vector<1x128xf32>
      %56 = arith.mulf %8, %48 : vector<1x128xf32>
      %57 = arith.addf %55, %56 : vector<1x128xf32>
      %c0_33 = arith.constant 0 : index
      %58 = arith.index_cast %45 : i32 to index
      %c0_34 = arith.constant 0 : index
      %59 = vector.load %arg12[%c0_33, %58, %c0_34] : memref<1x16x128xf32, #tpu.memory_space<vmem>>, vector<1x1x128xf32>
      %60 = vector.shape_cast %59 : vector<1x1x128xf32> to vector<1x128xf32>
      %61 = vector.shape_cast %57 : vector<1x128xf32> to vector<1x1x128xf32>
      tpu.vector_store %arg12[%c0_33, %58, %c0_34], %61 {strides = array<i32>} : memref<1x16x128xf32, #tpu.memory_space<vmem>>, vector<1x1x128xf32>,
      %62 = arith.mulf %3, %50 : vector<16x128xf32>
      %63 = arith.mulf %4, %41 : vector<16x128xf32>
      %64 = arith.mulf %5, %44 : vector<16x128xf32>
      %65 = arith.subf %63, %64 : vector<16x128xf32>
      %66 = arith.addf %62, %65 : vector<16x128xf32>
      %67 = arith.mulf %4, %44 : vector<16x128xf32>
      %68 = arith.mulf %5, %41 : vector<16x128xf32>
      %69 = arith.addf %67, %68 : vector<16x128xf32>
      %c2_i32_35 = arith.constant 2 : i32
      %70 = arith.addi %19, %c2_i32_35 : i32
      %c0_36 = arith.constant 0 : index
      %71 = arith.index_cast %70 : i32 to index
      %c0_37 = arith.constant 0 : index
      %72 = vector.load %arg3[%c0_36, %71, %c0_37] : memref<1x16x128xf32, #tpu.memory_space<vmem>>, vector<1x1x128xf32>
      %73 = vector.shape_cast %72 : vector<1x1x128xf32> to vector<1x128xf32>
      %74 = vector.shape_cast %73 : vector<1x128xf32> to vector<1x128xf32>
      %75 = vector.broadcast %74 : vector<1x128xf32> to vector<16x128xf32>
      %76 = arith.mulf %6, %66 : vector<16x128xf32>
      %77 = arith.mulf %7, %69 : vector<16x128xf32>
      %78 = arith.subf %76, %77 : vector<16x128xf32>
      %cst_38 = arith.constant dense<0.000000e+00> : vector<128xf32>
      %79 = vector.multi_reduction <add>, %78, %cst_38 [0] : vector<16x128xf32> to vector<128xf32>
      %80 = vector.shape_cast %79 : vector<128xf32> to vector<1x128xf32>
      %81 = arith.mulf %8, %73 : vector<1x128xf32>
      %82 = arith.addf %80, %81 : vector<1x128xf32>
      %c0_39 = arith.constant 0 : index
      %83 = arith.index_cast %70 : i32 to index
      %c0_40 = arith.constant 0 : index
      %84 = vector.load %arg12[%c0_39, %83, %c0_40] : memref<1x16x128xf32, #tpu.memory_space<vmem>>, vector<1x1x128xf32>
      %85 = vector.shape_cast %84 : vector<1x1x128xf32> to vector<1x128xf32>
      %86 = vector.shape_cast %82 : vector<1x128xf32> to vector<1x1x128xf32>
      tpu.vector_store %arg12[%c0_39, %83, %c0_40], %86 {strides = array<i32>} : memref<1x16x128xf32, #tpu.memory_space<vmem>>, vector<1x1x128xf32>,
      %87 = arith.mulf %3, %75 : vector<16x128xf32>
      %88 = arith.mulf %4, %66 : vector<16x128xf32>
      %89 = arith.mulf %5, %69 : vector<16x128xf32>
      %90 = arith.subf %88, %89 : vector<16x128xf32>
      %91 = arith.addf %87, %90 : vector<16x128xf32>
      %92 = arith.mulf %4, %69 : vector<16x128xf32>
      %93 = arith.mulf %5, %66 : vector<16x128xf32>
      %94 = arith.addf %92, %93 : vector<16x128xf32>
      %c3_i32 = arith.constant 3 : i32
      %95 = arith.addi %19, %c3_i32 : i32
      %c0_41 = arith.constant 0 : index
      %96 = arith.index_cast %95 : i32 to index
      %c0_42 = arith.constant 0 : index
      %97 = vector.load %arg3[%c0_41, %96, %c0_42] : memref<1x16x128xf32, #tpu.memory_space<vmem>>, vector<1x1x128xf32>
      %98 = vector.shape_cast %97 : vector<1x1x128xf32> to vector<1x128xf32>
      %99 = vector.shape_cast %98 : vector<1x128xf32> to vector<1x128xf32>
      %100 = vector.broadcast %99 : vector<1x128xf32> to vector<16x128xf32>
      %101 = arith.mulf %6, %91 : vector<16x128xf32>
      %102 = arith.mulf %7, %94 : vector<16x128xf32>
      %103 = arith.subf %101, %102 : vector<16x128xf32>
      %cst_43 = arith.constant dense<0.000000e+00> : vector<128xf32>
      %104 = vector.multi_reduction <add>, %103, %cst_43 [0] : vector<16x128xf32> to vector<128xf32>
      %105 = vector.shape_cast %104 : vector<128xf32> to vector<1x128xf32>
      %106 = arith.mulf %8, %98 : vector<1x128xf32>
      %107 = arith.addf %105, %106 : vector<1x128xf32>
      %c0_44 = arith.constant 0 : index
      %108 = arith.index_cast %95 : i32 to index
      %c0_45 = arith.constant 0 : index
      %109 = vector.load %arg12[%c0_44, %108, %c0_45] : memref<1x16x128xf32, #tpu.memory_space<vmem>>, vector<1x1x128xf32>
      %110 = vector.shape_cast %109 : vector<1x1x128xf32> to vector<1x128xf32>
      %111 = vector.shape_cast %107 : vector<1x128xf32> to vector<1x1x128xf32>
      tpu.vector_store %arg12[%c0_44, %108, %c0_45], %111 {strides = array<i32>} : memref<1x16x128xf32, #tpu.memory_space<vmem>>, vector<1x1x128xf32>,
      %112 = arith.mulf %3, %100 : vector<16x128xf32>
      %113 = arith.mulf %4, %91 : vector<16x128xf32>
      %114 = arith.mulf %5, %94 : vector<16x128xf32>
      %115 = arith.subf %113, %114 : vector<16x128xf32>
      %116 = arith.addf %112, %115 : vector<16x128xf32>
      %117 = arith.mulf %4, %94 : vector<16x128xf32>
      %118 = arith.mulf %5, %91 : vector<16x128xf32>
      %119 = arith.addf %117, %118 : vector<16x128xf32>
      %c4_i32 = arith.constant 4 : i32
      %120 = arith.addi %19, %c4_i32 : i32
      %c0_46 = arith.constant 0 : index
      %121 = arith.index_cast %120 : i32 to index
      %c0_47 = arith.constant 0 : index
      %122 = vector.load %arg3[%c0_46, %121, %c0_47] : memref<1x16x128xf32, #tpu.memory_space<vmem>>, vector<1x1x128xf32>
      %123 = vector.shape_cast %122 : vector<1x1x128xf32> to vector<1x128xf32>
      %124 = vector.shape_cast %123 : vector<1x128xf32> to vector<1x128xf32>
      %125 = vector.broadcast %124 : vector<1x128xf32> to vector<16x128xf32>
      %126 = arith.mulf %6, %116 : vector<16x128xf32>
      %127 = arith.mulf %7, %119 : vector<16x128xf32>
      %128 = arith.subf %126, %127 : vector<16x128xf32>
      %cst_48 = arith.constant dense<0.000000e+00> : vector<128xf32>
      %129 = vector.multi_reduction <add>, %128, %cst_48 [0] : vector<16x128xf32> to vector<128xf32>
      %130 = vector.shape_cast %129 : vector<128xf32> to vector<1x128xf32>
      %131 = arith.mulf %8, %123 : vector<1x128xf32>
      %132 = arith.addf %130, %131 : vector<1x128xf32>
      %c0_49 = arith.constant 0 : index
      %133 = arith.index_cast %120 : i32 to index
      %c0_50 = arith.constant 0 : index
      %134 = vector.load %arg12[%c0_49, %133, %c0_50] : memref<1x16x128xf32, #tpu.memory_space<vmem>>, vector<1x1x128xf32>
      %135 = vector.shape_cast %134 : vector<1x1x128xf32> to vector<1x128xf32>
      %136 = vector.shape_cast %132 : vector<1x128xf32> to vector<1x1x128xf32>
      tpu.vector_store %arg12[%c0_49, %133, %c0_50], %136 {strides = array<i32>} : memref<1x16x128xf32, #tpu.memory_space<vmem>>, vector<1x1x128xf32>,
      %137 = arith.mulf %3, %125 : vector<16x128xf32>
      %138 = arith.mulf %4, %116 : vector<16x128xf32>
      %139 = arith.mulf %5, %119 : vector<16x128xf32>
      %140 = arith.subf %138, %139 : vector<16x128xf32>
      %141 = arith.addf %137, %140 : vector<16x128xf32>
      %142 = arith.mulf %4, %119 : vector<16x128xf32>
      %143 = arith.mulf %5, %116 : vector<16x128xf32>
      %144 = arith.addf %142, %143 : vector<16x128xf32>
      %c5_i32 = arith.constant 5 : i32
      %145 = arith.addi %19, %c5_i32 : i32
      %c0_51 = arith.constant 0 : index
      %146 = arith.index_cast %145 : i32 to index
      %c0_52 = arith.constant 0 : index
      %147 = vector.load %arg3[%c0_51, %146, %c0_52] : memref<1x16x128xf32, #tpu.memory_space<vmem>>, vector<1x1x128xf32>
      %148 = vector.shape_cast %147 : vector<1x1x128xf32> to vector<1x128xf32>
      %149 = vector.shape_cast %148 : vector<1x128xf32> to vector<1x128xf32>
      %150 = vector.broadcast %149 : vector<1x128xf32> to vector<16x128xf32>
      %151 = arith.mulf %6, %141 : vector<16x128xf32>
      %152 = arith.mulf %7, %144 : vector<16x128xf32>
      %153 = arith.subf %151, %152 : vector<16x128xf32>
      %cst_53 = arith.constant dense<0.000000e+00> : vector<128xf32>
      %154 = vector.multi_reduction <add>, %153, %cst_53 [0] : vector<16x128xf32> to vector<128xf32>
      %155 = vector.shape_cast %154 : vector<128xf32> to vector<1x128xf32>
      %156 = arith.mulf %8, %148 : vector<1x128xf32>
      %157 = arith.addf %155, %156 : vector<1x128xf32>
      %c0_54 = arith.constant 0 : index
      %158 = arith.index_cast %145 : i32 to index
      %c0_55 = arith.constant 0 : index
      %159 = vector.load %arg12[%c0_54, %158, %c0_55] : memref<1x16x128xf32, #tpu.memory_space<vmem>>, vector<1x1x128xf32>
      %160 = vector.shape_cast %159 : vector<1x1x128xf32> to vector<1x128xf32>
      %161 = vector.shape_cast %157 : vector<1x128xf32> to vector<1x1x128xf32>
      tpu.vector_store %arg12[%c0_54, %158, %c0_55], %161 {strides = array<i32>} : memref<1x16x128xf32, #tpu.memory_space<vmem>>, vector<1x1x128xf32>,
      %162 = arith.mulf %3, %150 : vector<16x128xf32>
      %163 = arith.mulf %4, %141 : vector<16x128xf32>
      %164 = arith.mulf %5, %144 : vector<16x128xf32>
      %165 = arith.subf %163, %164 : vector<16x128xf32>
      %166 = arith.addf %162, %165 : vector<16x128xf32>
      %167 = arith.mulf %4, %144 : vector<16x128xf32>
      %168 = arith.mulf %5, %141 : vector<16x128xf32>
      %169 = arith.addf %167, %168 : vector<16x128xf32>
      %c6_i32 = arith.constant 6 : i32
      %170 = arith.addi %19, %c6_i32 : i32
      %c0_56 = arith.constant 0 : index
      %171 = arith.index_cast %170 : i32 to index
      %c0_57 = arith.constant 0 : index
      %172 = vector.load %arg3[%c0_56, %171, %c0_57] : memref<1x16x128xf32, #tpu.memory_space<vmem>>, vector<1x1x128xf32>
      %173 = vector.shape_cast %172 : vector<1x1x128xf32> to vector<1x128xf32>
      %174 = vector.shape_cast %173 : vector<1x128xf32> to vector<1x128xf32>
      %175 = vector.broadcast %174 : vector<1x128xf32> to vector<16x128xf32>
      %176 = arith.mulf %6, %166 : vector<16x128xf32>
      %177 = arith.mulf %7, %169 : vector<16x128xf32>
      %178 = arith.subf %176, %177 : vector<16x128xf32>
      %cst_58 = arith.constant dense<0.000000e+00> : vector<128xf32>
      %179 = vector.multi_reduction <add>, %178, %cst_58 [0] : vector<16x128xf32> to vector<128xf32>
      %180 = vector.shape_cast %179 : vector<128xf32> to vector<1x128xf32>
      %181 = arith.mulf %8, %173 : vector<1x128xf32>
      %182 = arith.addf %180, %181 : vector<1x128xf32>
      %c0_59 = arith.constant 0 : index
      %183 = arith.index_cast %170 : i32 to index
      %c0_60 = arith.constant 0 : index
      %184 = vector.load %arg12[%c0_59, %183, %c0_60] : memref<1x16x128xf32, #tpu.memory_space<vmem>>, vector<1x1x128xf32>
      %185 = vector.shape_cast %184 : vector<1x1x128xf32> to vector<1x128xf32>
      %186 = vector.shape_cast %182 : vector<1x128xf32> to vector<1x1x128xf32>
      tpu.vector_store %arg12[%c0_59, %183, %c0_60], %186 {strides = array<i32>} : memref<1x16x128xf32, #tpu.memory_space<vmem>>, vector<1x1x128xf32>,
      %187 = arith.mulf %3, %175 : vector<16x128xf32>
      %188 = arith.mulf %4, %166 : vector<16x128xf32>
      %189 = arith.mulf %5, %169 : vector<16x128xf32>
      %190 = arith.subf %188, %189 : vector<16x128xf32>
      %191 = arith.addf %187, %190 : vector<16x128xf32>
      %192 = arith.mulf %4, %169 : vector<16x128xf32>
      %193 = arith.mulf %5, %166 : vector<16x128xf32>
      %194 = arith.addf %192, %193 : vector<16x128xf32>
      %c7_i32 = arith.constant 7 : i32
      %195 = arith.addi %19, %c7_i32 : i32
      %c0_61 = arith.constant 0 : index
      %196 = arith.index_cast %195 : i32 to index
      %c0_62 = arith.constant 0 : index
      %197 = vector.load %arg3[%c0_61, %196, %c0_62] : memref<1x16x128xf32, #tpu.memory_space<vmem>>, vector<1x1x128xf32>
      %198 = vector.shape_cast %197 : vector<1x1x128xf32> to vector<1x128xf32>
      %199 = vector.shape_cast %198 : vector<1x128xf32> to vector<1x128xf32>
      %200 = vector.broadcast %199 : vector<1x128xf32> to vector<16x128xf32>
      %201 = arith.mulf %6, %191 : vector<16x128xf32>
      %202 = arith.mulf %7, %194 : vector<16x128xf32>
      %203 = arith.subf %201, %202 : vector<16x128xf32>
      %cst_63 = arith.constant dense<0.000000e+00> : vector<128xf32>
      %204 = vector.multi_reduction <add>, %203, %cst_63 [0] : vector<16x128xf32> to vector<128xf32>
      %205 = vector.shape_cast %204 : vector<128xf32> to vector<1x128xf32>
      %206 = arith.mulf %8, %198 : vector<1x128xf32>
      %207 = arith.addf %205, %206 : vector<1x128xf32>
      %c0_64 = arith.constant 0 : index
      %208 = arith.index_cast %195 : i32 to index
      %c0_65 = arith.constant 0 : index
      %209 = vector.load %arg12[%c0_64, %208, %c0_65] : memref<1x16x128xf32, #tpu.memory_space<vmem>>, vector<1x1x128xf32>
      %210 = vector.shape_cast %209 : vector<1x1x128xf32> to vector<1x128xf32>
      %211 = vector.shape_cast %207 : vector<1x128xf32> to vector<1x1x128xf32>
      tpu.vector_store %arg12[%c0_64, %208, %c0_65], %211 {strides = array<i32>} : memref<1x16x128xf32, #tpu.memory_space<vmem>>, vector<1x1x128xf32>,
      %212 = arith.mulf %3, %200 : vector<16x128xf32>
      %213 = arith.mulf %4, %191 : vector<16x128xf32>
      %214 = arith.mulf %5, %194 : vector<16x128xf32>
      %215 = arith.subf %213, %214 : vector<16x128xf32>
      %216 = arith.addf %212, %215 : vector<16x128xf32>
      %217 = arith.mulf %4, %194 : vector<16x128xf32>
      %218 = arith.mulf %5, %191 : vector<16x128xf32>
      %219 = arith.addf %217, %218 : vector<16x128xf32>
      scf.yield %216, %219 : vector<16x128xf32>, vector<16x128xf32>
    }
    %c2_i32_17 = arith.constant 2 : i32
    %c0_18 = arith.constant 0 : index
    %c0_19 = arith.constant 0 : index
    %13 = vector.load %arg15[%c0_18, %c0_19] : memref<16x128xf32, #tpu.memory_space<vmem>>, vector<16x128xf32>
    tpu.vector_store %arg15[%c0_18, %c0_19], %12#0 {strides = array<i32>} : memref<16x128xf32, #tpu.memory_space<vmem>>, vector<16x128xf32>,
    %c0_20 = arith.constant 0 : index
    %c0_21 = arith.constant 0 : index
    %14 = vector.load %arg16[%c0_20, %c0_21] : memref<16x128xf32, #tpu.memory_space<vmem>>, vector<16x128xf32>
    tpu.vector_store %arg16[%c0_20, %c0_21], %12#1 {strides = array<i32>} : memref<16x128xf32, #tpu.memory_space<vmem>>, vector<16x128xf32>,
    %c0_i32_22 = arith.constant 0 : i32
    %15 = arith.cmpi eq, %arg2, %c0_i32_22 : i32
    %16 = arith.extui %15 : i1 to i32
    %c0_i32_23 = arith.constant 0 : i32
    %17 = arith.cmpi ne, %16, %c0_i32_23 : i32
    scf.if %17 {
      %c0_24 = arith.constant 0 : index
      %c0_25 = arith.constant 0 : index
      %c0_26 = arith.constant 0 : index
      %18 = vector.load %arg13[%c0_24, %c0_25, %c0_26] : memref<1x16x128xf32, #tpu.memory_space<vmem>>, vector<1x16x128xf32>
      %19 = vector.shape_cast %18 : vector<1x16x128xf32> to vector<16x128xf32>
      %20 = vector.shape_cast %12#0 : vector<16x128xf32> to vector<1x16x128xf32>
      tpu.vector_store %arg13[%c0_24, %c0_25, %c0_26], %20 {strides = array<i32>} : memref<1x16x128xf32, #tpu.memory_space<vmem>>, vector<1x16x128xf32>,
      %c0_27 = arith.constant 0 : index
      %c0_28 = arith.constant 0 : index
      %c0_29 = arith.constant 0 : index
      %21 = vector.load %arg14[%c0_27, %c0_28, %c0_29] : memref<1x16x128xf32, #tpu.memory_space<vmem>>, vector<1x16x128xf32>
      %22 = vector.shape_cast %21 : vector<1x16x128xf32> to vector<16x128xf32>
      %23 = vector.shape_cast %12#1 : vector<16x128xf32> to vector<1x16x128xf32>
      tpu.vector_store %arg14[%c0_27, %c0_28, %c0_29], %23 {strides = array<i32>} : memref<1x16x128xf32, #tpu.memory_space<vmem>>, vector<1x16x128xf32>,
    } else {
    }
    return
  }
  func.func @transform_0(%arg0: i32, %arg1: i32, %arg2: i32) -> (i32, i32, i32) {
    %c0_i32 = arith.constant 0 : i32
    return %arg1, %arg2, %arg0 : i32, i32, i32
  }
  func.func @transform_1(%arg0: i32, %arg1: i32, %arg2: i32) -> (i32, i32) {
    %c0_i32 = arith.constant 0 : i32
    %c0_i32_0 = arith.constant 0 : i32
    return %c0_i32, %arg0 : i32, i32
  }
  func.func @transform_2(%arg0: i32, %arg1: i32, %arg2: i32) -> (i32, i32) {
    %c0_i32 = arith.constant 0 : i32
    %c0_i32_0 = arith.constant 0 : i32
    return %c0_i32, %arg0 : i32, i32
  }
  func.func @transform_3(%arg0: i32, %arg1: i32, %arg2: i32) -> (i32, i32) {
    %c0_i32 = arith.constant 0 : i32
    %c0_i32_0 = arith.constant 0 : i32
    return %c0_i32, %arg0 : i32, i32
  }
  func.func @transform_4(%arg0: i32, %arg1: i32, %arg2: i32) -> (i32, i32) {
    %c0_i32 = arith.constant 0 : i32
    %c0_i32_0 = arith.constant 0 : i32
    return %c0_i32, %arg0 : i32, i32
  }
  func.func @transform_5(%arg0: i32, %arg1: i32, %arg2: i32) -> (i32, i32) {
    %c0_i32 = arith.constant 0 : i32
    %c0_i32_0 = arith.constant 0 : i32
    return %c0_i32, %arg0 : i32, i32
  }
  func.func @transform_6(%arg0: i32, %arg1: i32, %arg2: i32) -> (i32, i32) {
    %c0_i32 = arith.constant 0 : i32
    %c0_i32_0 = arith.constant 0 : i32
    return %c0_i32, %arg0 : i32, i32
  }
  func.func @transform_7(%arg0: i32, %arg1: i32, %arg2: i32) -> (i32, i32, i32) {
    %c0_i32 = arith.constant 0 : i32
    %c0_i32_0 = arith.constant 0 : i32
    return %arg1, %c0_i32, %arg0 : i32, i32, i32
  }
  func.func @transform_8(%arg0: i32, %arg1: i32, %arg2: i32) -> (i32, i32, i32) {
    %c0_i32 = arith.constant 0 : i32
    %c0_i32_0 = arith.constant 0 : i32
    return %arg1, %c0_i32, %arg0 : i32, i32, i32
  }
  func.func @transform_9(%arg0: i32, %arg1: i32, %arg2: i32) -> (i32, i32, i32) {
    %c0_i32 = arith.constant 0 : i32
    return %arg1, %arg2, %arg0 : i32, i32, i32
  }
  func.func @transform_10(%arg0: i32, %arg1: i32, %arg2: i32) -> (i32, i32, i32) {
    %c0_i32 = arith.constant 0 : i32
    %c0_i32_0 = arith.constant 0 : i32
    return %arg1, %c0_i32, %arg0 : i32, i32, i32
  }
  func.func @transform_11(%arg0: i32, %arg1: i32, %arg2: i32) -> (i32, i32, i32) {
    %c0_i32 = arith.constant 0 : i32
    %c0_i32_0 = arith.constant 0 : i32
    return %arg1, %c0_i32, %arg0 : i32, i32, i32
  }
}

</mosaic_0001>

<llo_original>
// kernel: custom-call
$region0: #{custom-call}
  %s0 = inlined_call_operand.vmem [shape: f32[2,32,16], index: 0, kind: input, shape index: {}]
  %s1 = inlined_call_operand.vmem [shape: f32[2,32,16], index: 1, kind: input, shape index: {}]
  %s2 = inlined_call_operand.hbm [shape: c64[2,32,16], index: 2, kind: output, shape index: {}]
  %s3 = scalar_lea.hbm %s2, 512
  $region1: #{custom-call} parent=0
    #allocation0 [shape = 's32[1]{0}', space=sflag, size = 0x4, scoped, tag = 'scoped memory for custom-call']
    %4 = vsyncpa [#allocation0], 0
    %s5 = sshll.u32 %s0, 4
    %s6 = int_to_ptr.vmem [resolvable:$true] %s5
    %8 = dma.vmem_to_hbm [thread:$0]  %s6, 512, %s2, [#allocation0]
    %9 = dma.done [#allocation0], 512
    %10 = vsyncpa [#allocation0], 1
  $region2: #{custom-call} parent=0
    #allocation1 [shape = 's32[1]{0}', space=sflag, size = 0x4, scoped, tag = 'scoped memory for custom-call']
    %11 = vsyncpa [#allocation1], 0
    %s12 = sshll.u32 %s1, 4
    %s13 = int_to_ptr.vmem [resolvable:$true] %s12
    %15 = dma.vmem_to_hbm [thread:$0]  %s13, 512, %s3, [#allocation1]
    %16 = dma.done [#allocation1], 512
    %17 = vsyncpa [#allocation1], 1

// kernel: multihead_complex_ema_forward.1
$region0: #{multihead_complex_ema_forward.1}
  #allocation0 [shape = 'u32[]', space=smem, size = 0x4, offset = 0x4, fixed_abs, tag = 'smem constant byte address 0x4 - core index']
  #allocation1 [shape = 'u32[144,128]{1,0:T(1,128)}', space=vmem, size = 0x12000, scoped, tag = 'internal scratch']
  #allocation2 [shape = 'f32[16,128]{1,0:T(8,128)}', space=vmem, size = 0x2000, scoped, tag = 'scratch operand']
  #allocation3 [shape = 'f32[16,128]{1,0:T(8,128)}', space=vmem, size = 0x2000, scoped, tag = 'scratch operand']
  %s0 = inlined_call_operand.vmem [shape: f32[2,16,128], index: 0, kind: input, shape index: {}]
  %s1 = inlined_call_operand.vmem [shape: f32[16,128], index: 1, kind: input, shape index: {}]
  %s2 = inlined_call_operand.vmem [shape: f32[16,128], index: 2, kind: input, shape index: {}]
  %s3 = inlined_call_operand.vmem [shape: f32[16,128], index: 3, kind: input, shape index: {}]
  %s4 = inlined_call_operand.vmem [shape: f32[16,128], index: 4, kind: input, shape index: {}]
  %s5 = inlined_call_operand.vmem [shape: f32[16,128], index: 5, kind: input, shape index: {}]
  %s6 = inlined_call_operand.vmem [shape: f32[1,128], index: 6, kind: input, shape index: {}]
  %s7 = inlined_call_operand.vmem [shape: f32[2,16,128], index: 7, kind: input, shape index: {}, may-alias: {7,8}]
  %s8 = inlined_call_operand.vmem [shape: f32[2,16,128], index: 8, kind: input, shape index: {}, may-alias: {7,8}]
  %s9 = inlined_call_operand.vmem [shape: f32[2,16,128], index: 9, kind: output, shape index: {0}]
  %s10 = inlined_call_operand.vmem [shape: f32[2,16,128], index: 10, kind: output, shape index: {1}]
  %s11 = inlined_call_operand.vmem [shape: f32[2,16,128], index: 11, kind: output, shape index: {2}]
  %12 = xla_tuple %s9, %s10, %s11
  %s13 = sld [smem:[#allocation0]]
  $region100: #{multihead_complex_ema_forward.1} parent=0
    _
  %s15 = ssub.s32 1, %s13
  %s16 = scalar_select 0, %s15, %s13
  loop: start=0, step=1, limit=4
  $region2: #{multihead_complex_ema_forward.1} parent=0 // loop_pre_header
    _
  $region3: #{multihead_complex_ema_forward.1} parent=0 // loop_header
    %s18 = sphi 0, %s22
    %p19 = scmp.ge.s32.totalorder %s18, 4
    %s25 = sphi 0, %s44
    %s26 = sphi 0, %s40
    %s27 = sphi 0, %s36
    %s28 = sphi 0, %s25
    %s29 = sphi 0, %s26
    %s30 = sphi 0, %s27
    %s31 = sphi 0, %s28
    %s32 = sphi 0, %s29
    %s33 = sphi 0, %s30
    %s51 = sphi 0, %s53
    %s54 = sphi 0, %s51
    %s55 = sphi 0, %s54
    %s71 = sphi 0, %s55
    %s77 = sphi 0, %s79
    %s80 = sphi 0, %s77
    %s81 = sphi 0, %s80
    %s97 = sphi 0, %s81
    %s103 = sphi 0, %s105
    %s106 = sphi 0, %s103
    %s107 = sphi 0, %s106
    %s123 = sphi 0, %s107
    %s129 = sphi 0, %s131
    %s132 = sphi 0, %s129
    %s133 = sphi 0, %s132
    %s149 = sphi 0, %s133
    %s155 = sphi 0, %s157
    %s158 = sphi 0, %s155
    %s159 = sphi 0, %s158
    %s175 = sphi 0, %s159
    %s181 = sphi 0, %s183
    %s184 = sphi 0, %s181
    %s185 = sphi 0, %s184
    %s201 = sphi 0, %s185
    %s207 = sphi 0, %s209
    %s210 = sphi 0, %s207
    %s211 = sphi 0, %s210
    %s227 = sphi 0, %s211
    %s235 = sphi 0, %s237
    %s238 = sphi 0, %s235
    %s239 = sphi 0, %s238
    %s255 = sphi 0, %s239
    %s263 = sphi 0, %s265
    %s266 = sphi 0, %s263
    %s267 = sphi 0, %s266
    %s283 = sphi 0, %s267
    %s293 = sphi 0, %s295
    %s296 = sphi 0, %s293
    %s297 = sphi 0, %s296
    %s313 = sphi 0, %s297
    %s321 = sphi 0, %s323
    %s324 = sphi 0, %s321
    %s325 = sphi 0, %s324
    %s341 = sphi 0, %s325
    %s349 = sphi 0, %s351
    %s352 = sphi 0, %s349
    %s353 = sphi 0, %s352
    %s369 = sphi 0, %s353
  $region4: #{multihead_complex_ema_forward.1} parent=0 // loop_header_branch
    %21 = sbr.rel (%p19) target = $region8
  $region5: #{multihead_complex_ema_forward.1} parent=0 // loop_body
    %s23 = ssub.s32 %s18, 1
    %s24 = ssub.s32 %s18, 2
    %s34 = sadd.s32 1, %s27
    %p35 = scmp.ge.s32.totalorder %s34, 1
    %s36 = scalar_select %p35, 0, %s34
    %s37 = sadd.s32 1, %s26
    %s38 = scalar_select %p35, %s37, %s26
    %p39 = scmp.ge.s32.totalorder %s38, 2
    %s40 = scalar_select %p39, 0, %s38
    %s41 = sadd.s32 1, %s25
    %s42 = scalar_select %p39, %s41, %s25
    %p43 = scmp.ge.s32.totalorder %s42, 1
    %s44 = scalar_select %p43, 0, %s42
    %s45 = ssub.s32 %s26, %s40
    %s46 = ssub.s32 %s27, %s36
    %s47 = sor.u32 %s45, %s46
    %s48 = ssub.s32 %s25, %s44
    %s49 = sor.u32 %s47, %s48
    %p50 = scmp.eq.s32.totalorder %s49, 0
    %s52 = sadd.s32 %s51, 1
    %s53 = scalar_select %p50, %s51, %s52
    %p56 = pneg %p50
    %p57 = scmp.eq.s32.totalorder %s18, 1
    %p58 = por %p56, %p57
    %p59 = scmp.ne.s32.totalorder %s51, %s54
    %p60 = scmp.eq.s32.totalorder %s18, 0
    %p61 = por %p59, %p60
    %p62 = scmp.ne.s32.totalorder %s51, %s54
    %p63 = scmp.eq.s32.totalorder %s23, 1
    %p64 = por %p62, %p63
    %p65 = scmp.ne.s32.totalorder %s54, %s55
    %p66 = scmp.eq.s32.totalorder %s23, 0
    %p67 = por %p65, %p66
    %p68 = scmp.ne.s32.totalorder %s54, %s55
    %p69 = scmp.eq.s32.totalorder %s24, 1
    %p70 = por %p68, %p69
    %p72 = scmp.ne.s32.totalorder %s55, %s71
    %p73 = scmp.eq.s32.totalorder %s24, 0
    %p74 = por %p72, %p73
    %s75 = ssub.s32 %s25, %s44
    %p76 = scmp.eq.s32.totalorder %s75, 0
    %s78 = sadd.s32 %s77, 1
    %s79 = scalar_select %p76, %s77, %s78
    %p82 = pneg %p76
    %p83 = scmp.eq.s32.totalorder %s18, 1
    %p84 = por %p82, %p83
    %p85 = scmp.ne.s32.totalorder %s77, %s80
    %p86 = scmp.eq.s32.totalorder %s18, 0
    %p87 = por %p85, %p86
    %p88 = scmp.ne.s32.totalorder %s77, %s80
    %p89 = scmp.eq.s32.totalorder %s23, 1
    %p90 = por %p88, %p89
    %p91 = scmp.ne.s32.totalorder %s80, %s81
    %p92 = scmp.eq.s32.totalorder %s23, 0
    %p93 = por %p91, %p92
    %p94 = scmp.ne.s32.totalorder %s80, %s81
    %p95 = scmp.eq.s32.totalorder %s24, 1
    %p96 = por %p94, %p95
    %p98 = scmp.ne.s32.totalorder %s81, %s97
    %p99 = scmp.eq.s32.totalorder %s24, 0
    %p100 = por %p98, %p99
    %s101 = ssub.s32 %s25, %s44
    %p102 = scmp.eq.s32.totalorder %s101, 0
    %s104 = sadd.s32 %s103, 1
    %s105 = scalar_select %p102, %s103, %s104
    %p108 = pneg %p102
    %p109 = scmp.eq.s32.totalorder %s18, 1
    %p110 = por %p108, %p109
    %p111 = scmp.ne.s32.totalorder %s103, %s106
    %p112 = scmp.eq.s32.totalorder %s18, 0
    %p113 = por %p111, %p112
    %p114 = scmp.ne.s32.totalorder %s103, %s106
    %p115 = scmp.eq.s32.totalorder %s23, 1
    %p116 = por %p114, %p115
    %p117 = scmp.ne.s32.totalorder %s106, %s107
    %p118 = scmp.eq.s32.totalorder %s23, 0
    %p119 = por %p117, %p118
    %p120 = scmp.ne.s32.totalorder %s106, %s107
    %p121 = scmp.eq.s32.totalorder %s24, 1
    %p122 = por %p120, %p121
    %p124 = scmp.ne.s32.totalorder %s107, %s123
    %p125 = scmp.eq.s32.totalorder %s24, 0
    %p126 = por %p124, %p125
    %s127 = ssub.s32 %s25, %s44
    %p128 = scmp.eq.s32.totalorder %s127, 0
    %s130 = sadd.s32 %s129, 1
    %s131 = scalar_select %p128, %s129, %s130
    %p134 = pneg %p128
    %p135 = scmp.eq.s32.totalorder %s18, 1
    %p136 = por %p134, %p135
    %p137 = scmp.ne.s32.totalorder %s129, %s132
    %p138 = scmp.eq.s32.totalorder %s18, 0
    %p139 = por %p137, %p138
    %p140 = scmp.ne.s32.totalorder %s129, %s132
    %p141 = scmp.eq.s32.totalorder %s23, 1
    %p142 = por %p140, %p141
    %p143 = scmp.ne.s32.totalorder %s132, %s133
    %p144 = scmp.eq.s32.totalorder %s23, 0
    %p145 = por %p143, %p144
    %p146 = scmp.ne.s32.totalorder %s132, %s133
    %p147 = scmp.eq.s32.totalorder %s24, 1
    %p148 = por %p146, %p147
    %p150 = scmp.ne.s32.totalorder %s133, %s149
    %p151 = scmp.eq.s32.totalorder %s24, 0
    %p152 = por %p150, %p151
    %s153 = ssub.s32 %s25, %s44
    %p154 = scmp.eq.s32.totalorder %s153, 0
    %s156 = sadd.s32 %s155, 1
    %s157 = scalar_select %p154, %s155, %s156
    %p160 = pneg %p154
    %p161 = scmp.eq.s32.totalorder %s18, 1
    %p162 = por %p160, %p161
    %p163 = scmp.ne.s32.totalorder %s155, %s158
    %p164 = scmp.eq.s32.totalorder %s18, 0
    %p165 = por %p163, %p164
    %p166 = scmp.ne.s32.totalorder %s155, %s158
    %p167 = scmp.eq.s32.totalorder %s23, 1
    %p168 = por %p166, %p167
    %p169 = scmp.ne.s32.totalorder %s158, %s159
    %p170 = scmp.eq.s32.totalorder %s23, 0
    %p171 = por %p169, %p170
    %p172 = scmp.ne.s32.totalorder %s158, %s159
    %p173 = scmp.eq.s32.totalorder %s24, 1
    %p174 = por %p172, %p173
    %p176 = scmp.ne.s32.totalorder %s159, %s175
    %p177 = scmp.eq.s32.totalorder %s24, 0
    %p178 = por %p176, %p177
    %s179 = ssub.s32 %s25, %s44
    %p180 = scmp.eq.s32.totalorder %s179, 0
    %s182 = sadd.s32 %s181, 1
    %s183 = scalar_select %p180, %s181, %s182
    %p186 = pneg %p180
    %p187 = scmp.eq.s32.totalorder %s18, 1
    %p188 = por %p186, %p187
    %p189 = scmp.ne.s32.totalorder %s181, %s184
    %p190 = scmp.eq.s32.totalorder %s18, 0
    %p191 = por %p189, %p190
    %p192 = scmp.ne.s32.totalorder %s181, %s184
    %p193 = scmp.eq.s32.totalorder %s23, 1
    %p194 = por %p192, %p193
    %p195 = scmp.ne.s32.totalorder %s184, %s185
    %p196 = scmp.eq.s32.totalorder %s23, 0
    %p197 = por %p195, %p196
    %p198 = scmp.ne.s32.totalorder %s184, %s185
    %p199 = scmp.eq.s32.totalorder %s24, 1
    %p200 = por %p198, %p199
    %p202 = scmp.ne.s32.totalorder %s185, %s201
    %p203 = scmp.eq.s32.totalorder %s24, 0
    %p204 = por %p202, %p203
    %s205 = ssub.s32 %s25, %s44
    %p206 = scmp.eq.s32.totalorder %s205, 0
    %s208 = sadd.s32 %s207, 1
    %s209 = scalar_select %p206, %s207, %s208
    %p212 = pneg %p206
    %p213 = scmp.eq.s32.totalorder %s18, 1
    %p214 = por %p212, %p213
    %p215 = scmp.ne.s32.totalorder %s207, %s210
    %p216 = scmp.eq.s32.totalorder %s18, 0
    %p217 = por %p215, %p216
    %p218 = scmp.ne.s32.totalorder %s207, %s210
    %p219 = scmp.eq.s32.totalorder %s23, 1
    %p220 = por %p218, %p219
    %p221 = scmp.ne.s32.totalorder %s210, %s211
    %p222 = scmp.eq.s32.totalorder %s23, 0
    %p223 = por %p221, %p222
    %p224 = scmp.ne.s32.totalorder %s210, %s211
    %p225 = scmp.eq.s32.totalorder %s24, 1
    %p226 = por %p224, %p225
    %p228 = scmp.ne.s32.totalorder %s211, %s227
    %p229 = scmp.eq.s32.totalorder %s24, 0
    %p230 = por %p228, %p229
    %s231 = ssub.s32 %s26, %s40
    %s232 = ssub.s32 %s25, %s44
    %s233 = sor.u32 %s231, %s232
    %p234 = scmp.eq.s32.totalorder %s233, 0
    %s236 = sadd.s32 %s235, 1
    %s237 = scalar_select %p234, %s235, %s236
    %p240 = pneg %p234
    %p241 = scmp.eq.s32.totalorder %s18, 1
    %p242 = por %p240, %p241
    %p243 = scmp.ne.s32.totalorder %s235, %s238
    %p244 = scmp.eq.s32.totalorder %s18, 0
    %p245 = por %p243, %p244
    %p246 = scmp.ne.s32.totalorder %s235, %s238
    %p247 = scmp.eq.s32.totalorder %s23, 1
    %p248 = por %p246, %p247
    %p249 = scmp.ne.s32.totalorder %s238, %s239
    %p250 = scmp.eq.s32.totalorder %s23, 0
    %p251 = por %p249, %p250
    %p252 = scmp.ne.s32.totalorder %s238, %s239
    %p253 = scmp.eq.s32.totalorder %s24, 1
    %p254 = por %p252, %p253
    %p256 = scmp.ne.s32.totalorder %s239, %s255
    %p257 = scmp.eq.s32.totalorder %s24, 0
    %p258 = por %p256, %p257
    %s259 = ssub.s32 %s26, %s40
    %s260 = ssub.s32 %s25, %s44
    %s261 = sor.u32 %s259, %s260
    %p262 = scmp.eq.s32.totalorder %s261, 0
    %s264 = sadd.s32 %s263, 1
    %s265 = scalar_select %p262, %s263, %s264
    %p268 = pneg %p262
    %p269 = scmp.eq.s32.totalorder %s18, 1
    %p270 = por %p268, %p269
    %p271 = scmp.ne.s32.totalorder %s263, %s266
    %p272 = scmp.eq.s32.totalorder %s18, 0
    %p273 = por %p271, %p272
    %p274 = scmp.ne.s32.totalorder %s263, %s266
    %p275 = scmp.eq.s32.totalorder %s23, 1
    %p276 = por %p274, %p275
    %p277 = scmp.ne.s32.totalorder %s266, %s267
    %p278 = scmp.eq.s32.totalorder %s23, 0
    %p279 = por %p277, %p278
    %p280 = scmp.ne.s32.totalorder %s266, %s267
    %p281 = scmp.eq.s32.totalorder %s24, 1
    %p282 = por %p280, %p281
    %p284 = scmp.ne.s32.totalorder %s267, %s283
    %p285 = scmp.eq.s32.totalorder %s24, 0
    %p286 = por %p284, %p285
    %s287 = ssub.s32 %s26, %s40
    %s288 = ssub.s32 %s27, %s36
    %s289 = sor.u32 %s287, %s288
    %s290 = ssub.s32 %s25, %s44
    %s291 = sor.u32 %s289, %s290
    %p292 = scmp.eq.s32.totalorder %s291, 0
    %s294 = sadd.s32 %s293, 1
    %s295 = scalar_select %p292, %s293, %s294
    %p298 = pneg %p292
    %p299 = scmp.eq.s32.totalorder %s18, 1
    %p300 = por %p298, %p299
    %p301 = scmp.ne.s32.totalorder %s293, %s296
    %p302 = scmp.eq.s32.totalorder %s18, 0
    %p303 = por %p301, %p302
    %p304 = scmp.ne.s32.totalorder %s293, %s296
    %p305 = scmp.eq.s32.totalorder %s23, 1
    %p306 = por %p304, %p305
    %p307 = scmp.ne.s32.totalorder %s296, %s297
    %p308 = scmp.eq.s32.totalorder %s23, 0
    %p309 = por %p307, %p308
    %p310 = scmp.ne.s32.totalorder %s296, %s297
    %p311 = scmp.eq.s32.totalorder %s24, 1
    %p312 = por %p310, %p311
    %p314 = scmp.ne.s32.totalorder %s297, %s313
    %p315 = scmp.eq.s32.totalorder %s24, 0
    %p316 = por %p314, %p315
    %s317 = ssub.s32 %s26, %s40
    %s318 = ssub.s32 %s25, %s44
    %s319 = sor.u32 %s317, %s318
    %p320 = scmp.eq.s32.totalorder %s319, 0
    %s322 = sadd.s32 %s321, 1
    %s323 = scalar_select %p320, %s321, %s322
    %p326 = pneg %p320
    %p327 = scmp.eq.s32.totalorder %s18, 1
    %p328 = por %p326, %p327
    %p329 = scmp.ne.s32.totalorder %s321, %s324
    %p330 = scmp.eq.s32.totalorder %s18, 0
    %p331 = por %p329, %p330
    %p332 = scmp.ne.s32.totalorder %s321, %s324
    %p333 = scmp.eq.s32.totalorder %s23, 1
    %p334 = por %p332, %p333
    %p335 = scmp.ne.s32.totalorder %s324, %s325
    %p336 = scmp.eq.s32.totalorder %s23, 0
    %p337 = por %p335, %p336
    %p338 = scmp.ne.s32.totalorder %s324, %s325
    %p339 = scmp.eq.s32.totalorder %s24, 1
    %p340 = por %p338, %p339
    %p342 = scmp.ne.s32.totalorder %s325, %s341
    %p343 = scmp.eq.s32.totalorder %s24, 0
    %p344 = por %p342, %p343
    %s345 = ssub.s32 %s26, %s40
    %s346 = ssub.s32 %s25, %s44
    %s347 = sor.u32 %s345, %s346
    %p348 = scmp.eq.s32.totalorder %s347, 0
    %s350 = sadd.s32 %s349, 1
    %s351 = scalar_select %p348, %s349, %s350
    %p354 = pneg %p348
    %p355 = scmp.eq.s32.totalorder %s18, 1
    %p356 = por %p354, %p355
    %p357 = scmp.ne.s32.totalorder %s349, %s352
    %p358 = scmp.eq.s32.totalorder %s18, 0
    %p359 = por %p357, %p358
    %p360 = scmp.ne.s32.totalorder %s349, %s352
    %p361 = scmp.eq.s32.totalorder %s23, 1
    %p362 = por %p360, %p361
    %p363 = scmp.ne.s32.totalorder %s352, %s353
    %p364 = scmp.eq.s32.totalorder %s23, 0
    %p365 = por %p363, %p364
    %p366 = scmp.ne.s32.totalorder %s352, %s353
    %p367 = scmp.eq.s32.totalorder %s24, 1
    %p368 = por %p366, %p367
    %p370 = scmp.ne.s32.totalorder %s353, %s369
    %p371 = scmp.eq.s32.totalorder %s24, 0
    %p372 = por %p370, %p371
    %p373 = scmp.le.s32.totalorder 1, %s18
    %p374 = scmp.lt.s32.totalorder %s18, 3
    %p375 = pnand %p373, %p374
    %p376 = pneg %p375
    // Predicated region
    $region9: #{multihead_complex_ema_forward.1} parent=5 // pred_check
      _
    $region10: #{multihead_complex_ema_forward.1} parent=5 // pred_check_branch
      %378 = sbr.rel (%p375) target = $region12
    $region11: #{multihead_complex_ema_forward.1} parent=5 // pred_region
      %s379 = ssub.s32 %s18, 1
      // Predicated region
      $region13: #{multihead_complex_ema_forward.1} parent=11 // pred_check
        %p380 = pneg %p93
      $region14: #{multihead_complex_ema_forward.1} parent=11 // pred_check_branch
        %382 = sbr.rel (%p380) target = $region16
      $region15: #{multihead_complex_ema_forward.1} parent=11 // pred_region
        %p383 = scmp.lt.s32.totalorder %s28, 0
        %s384 = scalar_select %p383, %s28, 0
        %s385 = smul.addr %s384, 8
        %s386 = scalar_lea.vmem %s1, %s385
      $region16: #{multihead_complex_ema_forward.1} parent=11 // pred_fallthru
        _
      // Predicated region
      $region17: #{multihead_complex_ema_forward.1} parent=11 // pred_check
        %p387 = pneg %p119
      $region18: #{multihead_complex_ema_forward.1} parent=11 // pred_check_branch
        %389 = sbr.rel (%p387) target = $region20
      $region19: #{multihead_complex_ema_forward.1} parent=11 // pred_region
        %p390 = scmp.lt.s32.totalorder %s28, 0
        %s391 = scalar_select %p390, %s28, 0
        %s392 = smul.addr %s391, 8
        %s393 = scalar_lea.vmem %s2, %s392
      $region20: #{multihead_complex_ema_forward.1} parent=11 // pred_fallthru
        _
      // Predicated region
      $region21: #{multihead_complex_ema_forward.1} parent=11 // pred_check
        %p394 = pneg %p145
      $region22: #{multihead_complex_ema_forward.1} parent=11 // pred_check_branch
        %396 = sbr.rel (%p394) target = $region24
      $region23: #{multihead_complex_ema_forward.1} parent=11 // pred_region
        %p397 = scmp.lt.s32.totalorder %s28, 0
        %s398 = scalar_select %p397, %s28, 0
        %s399 = smul.addr %s398, 8
        %s400 = scalar_lea.vmem %s3, %s399
      $region24: #{multihead_complex_ema_forward.1} parent=11 // pred_fallthru
        _
      // Predicated region
      $region25: #{multihead_complex_ema_forward.1} parent=11 // pred_check
        %p401 = pneg %p171
      $region26: #{multihead_complex_ema_forward.1} parent=11 // pred_check_branch
        %403 = sbr.rel (%p401) target = $region28
      $region27: #{multihead_complex_ema_forward.1} parent=11 // pred_region
        %p404 = scmp.lt.s32.totalorder %s28, 0
        %s405 = scalar_select %p404, %s28, 0
        %s406 = smul.addr %s405, 8
        %s407 = scalar_lea.vmem %s4, %s406
      $region28: #{multihead_complex_ema_forward.1} parent=11 // pred_fallthru
        _
      // Predicated region
      $region29: #{multihead_complex_ema_forward.1} parent=11 // pred_check
        %p408 = pneg %p197
      $region30: #{multihead_complex_ema_forward.1} parent=11 // pred_check_branch
        %410 = sbr.rel (%p408) target = $region32
      $region31: #{multihead_complex_ema_forward.1} parent=11 // pred_region
        %p411 = scmp.lt.s32.totalorder %s28, 0
        %s412 = scalar_select %p411, %s28, 0
        %s413 = smul.addr %s412, 8
        %s414 = scalar_lea.vmem %s5, %s413
      $region32: #{multihead_complex_ema_forward.1} parent=11 // pred_fallthru
        _
      // Predicated region
      $region33: #{multihead_complex_ema_forward.1} parent=11 // pred_check
        %p415 = pneg %p223
      $region34: #{multihead_complex_ema_forward.1} parent=11 // pred_check_branch
        %417 = sbr.rel (%p415) target = $region36
      $region35: #{multihead_complex_ema_forward.1} parent=11 // pred_region
        %p418 = scmp.lt.s32.totalorder %s28, 0
        %s419 = scalar_select %p418, %s28, 0
        %s420 = scalar_lea.vmem %s6, %s419
      $region36: #{multihead_complex_ema_forward.1} parent=11 // pred_fallthru
        _
    $region12: #{multihead_complex_ema_forward.1} parent=5 // pred_fallthru
      _
    %p421 = scmp.lt.s32.totalorder %s18, 2
    // Predicated region
    $region37: #{multihead_complex_ema_forward.1} parent=5 // pred_check
      %p422 = pneg %p421
    $region38: #{multihead_complex_ema_forward.1} parent=5 // pred_check_branch
      %424 = sbr.rel (%p422) target = $region40
    $region39: #{multihead_complex_ema_forward.1} parent=5 // pred_region
      // Predicated region
      $region41: #{multihead_complex_ema_forward.1} parent=39 // pred_check
        %p425 = pneg %p61
      $region42: #{multihead_complex_ema_forward.1} parent=39 // pred_check_branch
        %427 = sbr.rel (%p425) target = $region44
      $region43: #{multihead_complex_ema_forward.1} parent=39 // pred_region
        %s428 = smul.u32 2, %s27
        %p429 = scmp.lt.s32.totalorder %s26, 1
        %s430 = scalar_select %p429, %s26, 1
        %p431 = scmp.lt.s32.totalorder %s428, 1
        %s432 = scalar_select %p431, %s428, 1
        %p433 = scmp.lt.s32.totalorder %s25, 0
        %s434 = scalar_select %p433, %s25, 0
        %s435 = sadd.s32 %s434, %s432
        %s436 = smul.addr %s430, 2
        %s437 = sadd.s32 %s435, %s436
        %s438 = smul.addr %s437, 8
        %s439 = scalar_lea.vmem %s0, %s438
        %s440 = smul.u32 2, %s27
      $region44: #{multihead_complex_ema_forward.1} parent=39 // pred_fallthru
        _
      // Predicated region
      $region45: #{multihead_complex_ema_forward.1} parent=39 // pred_check
        %p441 = pneg %p245
      $region46: #{multihead_complex_ema_forward.1} parent=39 // pred_check_branch
        %443 = sbr.rel (%p441) target = $region48
      $region47: #{multihead_complex_ema_forward.1} parent=39 // pred_region
        %p444 = scmp.lt.s32.totalorder %s26, 1
        %s445 = scalar_select %p444, %s26, 1
        %p446 = scmp.lt.s32.totalorder %s25, 0
        %s447 = scalar_select %p446, %s25, 0
        %s448 = smul.addr %s445, 2
        %s449 = sadd.s32 %s447, %s448
        %s450 = smul.addr %s449, 8
        %s451 = scalar_lea.vmem %s7, %s450
      $region48: #{multihead_complex_ema_forward.1} parent=39 // pred_fallthru
        _
      // Predicated region
      $region49: #{multihead_complex_ema_forward.1} parent=39 // pred_check
        %p452 = pneg %p273
      $region50: #{multihead_complex_ema_forward.1} parent=39 // pred_check_branch
        %454 = sbr.rel (%p452) target = $region52
      $region51: #{multihead_complex_ema_forward.1} parent=39 // pred_region
        %p455 = scmp.lt.s32.totalorder %s26, 1
        %s456 = scalar_select %p455, %s26, 1
        %p457 = scmp.lt.s32.totalorder %s25, 0
        %s458 = scalar_select %p457, %s25, 0
        %s459 = smul.addr %s456, 2
        %s460 = sadd.s32 %s458, %s459
        %s461 = smul.addr %s460, 8
        %s462 = scalar_lea.vmem %s8, %s461
      $region52: #{multihead_complex_ema_forward.1} parent=39 // pred_fallthru
        _
    $region40: #{multihead_complex_ema_forward.1} parent=5 // pred_fallthru
      _
    %p463 = scmp.le.s32.totalorder 1, %s18
    %p464 = scmp.lt.s32.totalorder %s18, 3
    %p465 = pnand %p463, %p464
    %p466 = pneg %p465
    // Predicated region
    $region53: #{multihead_complex_ema_forward.1} parent=5 // pred_check
      _
    $region54: #{multihead_complex_ema_forward.1} parent=5 // pred_check_branch
      %468 = sbr.rel (%p465) target = $region56
    $region55: #{multihead_complex_ema_forward.1} parent=5 // pred_region
      %s469 = ssub.s32 %s18, 1
      %s470 = smul.u32 2, %s30
      %p471 = scmp.lt.s32.totalorder %s29, 1
      %s472 = scalar_select %p471, %s29, 1
      %p473 = scmp.lt.s32.totalorder %s470, 1
      %s474 = scalar_select %p473, %s470, 1
      %p475 = scmp.lt.s32.totalorder %s28, 0
      %s476 = scalar_select %p475, %s28, 0
      %s477 = sadd.s32 %s476, %s474
      %s478 = smul.addr %s472, 2
      %s479 = sadd.s32 %s477, %s478
      %s480 = smul.addr %s479, 8
      %s481 = scalar_lea.vmem %s0, %s480
      %p482 = pneg %p67
      %p483 = pneg %p64
      %p484 = scmp.lt.s32.totalorder %s28, 0
      %s485 = scalar_select %p484, %s28, 0
      %s486 = smul.addr %s485, 8
      %s487 = scalar_lea.vmem %s1, %s486
      %p488 = pneg %p93
      %p489 = pneg %p90
      %p490 = scmp.lt.s32.totalorder %s28, 0
      %s491 = scalar_select %p490, %s28, 0
      %s492 = smul.addr %s491, 8
      %s493 = scalar_lea.vmem %s2, %s492
      %p494 = pneg %p119
      %p495 = pneg %p116
      %p496 = scmp.lt.s32.totalorder %s28, 0
      %s497 = scalar_select %p496, %s28, 0
      %s498 = smul.addr %s497, 8
      %s499 = scalar_lea.vmem %s3, %s498
      %p500 = pneg %p145
      %p501 = pneg %p142
      %p502 = scmp.lt.s32.totalorder %s28, 0
      %s503 = scalar_select %p502, %s28, 0
      %s504 = smul.addr %s503, 8
      %s505 = scalar_lea.vmem %s4, %s504
      %p506 = pneg %p171
      %p507 = pneg %p168
      %p508 = scmp.lt.s32.totalorder %s28, 0
      %s509 = scalar_select %p508, %s28, 0
      %s510 = smul.addr %s509, 8
      %s511 = scalar_lea.vmem %s5, %s510
      %p512 = pneg %p197
      %p513 = pneg %p194
      %p514 = scmp.lt.s32.totalorder %s28, 0
      %s515 = scalar_select %p514, %s28, 0
      %s516 = scalar_lea.vmem %s6, %s515
      %p517 = pneg %p223
      %p518 = pneg %p220
      %p519 = scmp.lt.s32.totalorder %s29, 1
      %s520 = scalar_select %p519, %s29, 1
      %p521 = scmp.lt.s32.totalorder %s28, 0
      %s522 = scalar_select %p521, %s28, 0
      %s523 = smul.addr %s520, 2
      %s524 = sadd.s32 %s522, %s523
      %s525 = smul.addr %s524, 8
      %s526 = scalar_lea.vmem %s7, %s525
      %p527 = pneg %p251
      %p528 = pneg %p248
      %p529 = scmp.lt.s32.totalorder %s29, 1
      %s530 = scalar_select %p529, %s29, 1
      %p531 = scmp.lt.s32.totalorder %s28, 0
      %s532 = scalar_select %p531, %s28, 0
      %s533 = smul.addr %s530, 2
      %s534 = sadd.s32 %s532, %s533
      %s535 = smul.addr %s534, 8
      %s536 = scalar_lea.vmem %s8, %s535
      %p537 = pneg %p279
      %p538 = pneg %p276
      %p539 = pneg %p309
      %p540 = pneg %p306
      %s541 = smul.u32 2, %s30
      %p542 = scmp.lt.s32.totalorder %s29, 1
      %s543 = scalar_select %p542, %s29, 1
      %p544 = scmp.lt.s32.totalorder %s541, 1
      %s545 = scalar_select %p544, %s541, 1
      %p546 = scmp.lt.s32.totalorder %s28, 0
      %s547 = scalar_select %p546, %s28, 0
      %s548 = sadd.s32 %s547, %s545
      %s549 = smul.addr %s543, 2
      %s550 = sadd.s32 %s548, %s549
      %s551 = smul.addr %s550, 8
      %s552 = scalar_lea.vmem %s9, %s551
      %p553 = pneg %p337
      %p554 = pneg %p334
      %p555 = scmp.lt.s32.totalorder %s29, 1
      %s556 = scalar_select %p555, %s29, 1
      %p557 = scmp.lt.s32.totalorder %s28, 0
      %s558 = scalar_select %p557, %s28, 0
      %s559 = smul.addr %s556, 2
      %s560 = sadd.s32 %s558, %s559
      %s561 = smul.addr %s560, 8
      %s562 = scalar_lea.vmem %s10, %s561
      %p563 = pneg %p365
      %p564 = pneg %p362
      %p565 = scmp.lt.s32.totalorder %s29, 1
      %s566 = scalar_select %p565, %s29, 1
      %p567 = scmp.lt.s32.totalorder %s28, 0
      %s568 = scalar_select %p567, %s28, 0
      %s569 = smul.addr %s566, 2
      %s570 = sadd.s32 %s568, %s569
      %s571 = smul.addr %s570, 8
      %s572 = scalar_lea.vmem %s11, %s571
      %s573 = smul.u32 2, %s30
      %p574 = scmp.lt.s32.totalorder %s29, 1
      %s575 = scalar_select %p574, %s29, 1
      %p576 = scmp.lt.s32.totalorder %s573, 1
      %s577 = scalar_select %p576, %s573, 1
      %p578 = scmp.lt.s32.totalorder %s28, 0
      %s579 = scalar_select %p578, %s28, 0
      %s580 = sadd.s32 %s579, %s577
      %s581 = smul.addr %s575, 2
      %s582 = sadd.s32 %s580, %s581
      %s583 = smul.addr %s582, 8
      %s584 = scalar_lea.vmem %s0, %s583
      %s585 = smul.u32 2, %s30
      %p586 = scmp.lt.s32.totalorder %s28, 0
      %s587 = scalar_select %p586, %s28, 0
      %s588 = smul.addr %s587, 8
      %s589 = scalar_lea.vmem %s1, %s588
      %p590 = scmp.lt.s32.totalorder %s28, 0
      %s591 = scalar_select %p590, %s28, 0
      %s592 = smul.addr %s591, 8
      %s593 = scalar_lea.vmem %s2, %s592
      %p594 = scmp.lt.s32.totalorder %s28, 0
      %s595 = scalar_select %p594, %s28, 0
      %s596 = smul.addr %s595, 8
      %s597 = scalar_lea.vmem %s3, %s596
      %p598 = scmp.lt.s32.totalorder %s28, 0
      %s599 = scalar_select %p598, %s28, 0
      %s600 = smul.addr %s599, 8
      %s601 = scalar_lea.vmem %s4, %s600
      %p602 = scmp.lt.s32.totalorder %s28, 0
      %s603 = scalar_select %p602, %s28, 0
      %s604 = smul.addr %s603, 8
      %s605 = scalar_lea.vmem %s5, %s604
      %p606 = scmp.lt.s32.totalorder %s28, 0
      %s607 = scalar_select %p606, %s28, 0
      %s608 = scalar_lea.vmem %s6, %s607
      %p609 = scmp.lt.s32.totalorder %s29, 1
      %s610 = scalar_select %p609, %s29, 1
      %p611 = scmp.lt.s32.totalorder %s28, 0
      %s612 = scalar_select %p611, %s28, 0
      %s613 = smul.addr %s610, 2
      %s614 = sadd.s32 %s612, %s613
      %s615 = smul.addr %s614, 8
      %s616 = scalar_lea.vmem %s7, %s615
      %p617 = scmp.lt.s32.totalorder %s29, 1
      %s618 = scalar_select %p617, %s29, 1
      %p619 = scmp.lt.s32.totalorder %s28, 0
      %s620 = scalar_select %p619, %s28, 0
      %s621 = smul.addr %s618, 2
      %s622 = sadd.s32 %s620, %s621
      %s623 = smul.addr %s622, 8
      %s624 = scalar_lea.vmem %s8, %s623
      %s625 = smul.u32 2, %s30
      %p626 = scmp.lt.s32.totalorder %s29, 1
      %s627 = scalar_select %p626, %s29, 1
      %p628 = scmp.lt.s32.totalorder %s625, 1
      %s629 = scalar_select %p628, %s625, 1
      %p630 = scmp.lt.s32.totalorder %s28, 0
      %s631 = scalar_select %p630, %s28, 0
      %s632 = sadd.s32 %s631, %s629
      %s633 = smul.addr %s627, 2
      %s634 = sadd.s32 %s632, %s633
      %s635 = smul.addr %s634, 8
      %s636 = scalar_lea.vmem %s9, %s635
      %s637 = smul.u32 2, %s30
      %p638 = scmp.lt.s32.totalorder %s29, 1
      %s639 = scalar_select %p638, %s29, 1
      %p640 = scmp.lt.s32.totalorder %s28, 0
      %s641 = scalar_select %p640, %s28, 0
      %s642 = smul.addr %s639, 2
      %s643 = sadd.s32 %s641, %s642
      %s644 = smul.addr %s643, 8
      %s645 = scalar_lea.vmem %s10, %s644
      %p646 = scmp.lt.s32.totalorder %s29, 1
      %s647 = scalar_select %p646, %s29, 1
      %p648 = scmp.lt.s32.totalorder %s28, 0
      %s649 = scalar_select %p648, %s28, 0
      %s650 = smul.addr %s647, 2
      %s651 = sadd.s32 %s649, %s650
      %s652 = smul.addr %s651, 8
      %s653 = scalar_lea.vmem %s11, %s652
      %p654 = scmp.eq.s32.totalorder %s30, 0
      // Predicated region
      $region57: #{multihead_complex_ema_forward.1} parent=55 // pred_check
        %p655 = pneg %p654
      $region58: #{multihead_complex_ema_forward.1} parent=55 // pred_check_branch
        %657 = sbr.rel (%p655) target = $region60
      $region59: #{multihead_complex_ema_forward.1} parent=55 // pred_region
        %v658 = vld [vmem:[%s616] sm:$0xff]
        %v659 = vld [vmem:[%s616 + $0x8] sm:$0xff]
        %660 = vst [vmem:[#allocation2] sm:$0xff] %v658
        %661 = vst [vmem:[#allocation2 + $0x8] sm:$0xff] %v659
        %v662 = vld [vmem:[%s624] sm:$0xff]
        %v663 = vld [vmem:[%s624 + $0x8] sm:$0xff]
        %664 = vst [vmem:[#allocation3] sm:$0xff] %v662
        %665 = vst [vmem:[#allocation3 + $0x8] sm:$0xff] %v663
      $region60: #{multihead_complex_ema_forward.1} parent=55 // pred_fallthru
        _
      %v666 = vld [vmem:[%s589] sm:$0xff]
      %v667 = vld [vmem:[%s589 + $0x8] sm:$0xff]
      %v668 = vld [vmem:[%s593] sm:$0xff]
      %v669 = vld [vmem:[%s593 + $0x8] sm:$0xff]
      %v670 = vld [vmem:[%s597] sm:$0xff]
      %v671 = vld [vmem:[%s597 + $0x8] sm:$0xff]
      %v672 = vld [vmem:[%s601] sm:$0xff]
      %v673 = vld [vmem:[%s601 + $0x8] sm:$0xff]
      %v674 = vld [vmem:[%s605] sm:$0xff]
      %v675 = vld [vmem:[%s605 + $0x8] sm:$0xff]
      %v676 = vld [vmem:[%s608] sm:$0x1]
      %v677 = vld [vmem:[#allocation2] sm:$0xff]
      %v678 = vld [vmem:[#allocation2 + $0x8] sm:$0xff]
      %v679 = vld [vmem:[#allocation3] sm:$0xff]
      %v680 = vld [vmem:[#allocation3 + $0x8] sm:$0xff]
      loop: start=0, step=1, limit=2
      $region61: #{multihead_complex_ema_forward.1} parent=55 // loop_pre_header
        _
      $region62: #{multihead_complex_ema_forward.1} parent=55 // loop_header
        %s682 = sphi 0, %s686
        %p683 = scmp.ge.s32.totalorder %s682, 2
        %v687 = vphi %v677, %v1003
        %v688 = vphi %v678, %v1004
        %v689 = vphi %v679, %v1009
        %v690 = vphi %v680, %v1010
      $region63: #{multihead_complex_ema_forward.1} parent=55 // loop_header_branch
        %685 = sbr.rel (%p683) target = $region67
      $region64: #{multihead_complex_ema_forward.1} parent=55 // loop_body
        %s691 = smul.u32 %s682, 8
        %s692 = scalar_lea.vmem %s584, %s691
        %v693 = vld [vmem:[%s692] sm:$0x1]
        %v694 = vlaneseq
        %v695 = vshrl.u32 %v694, 7
        %v696 = vsub.s32 0, %v695
        %v697 = vrot.slane %v693, %v696
        %v698 = vmul.f32 %v672, %v687
        %v699 = vmul.f32 %v673, %v688
        %v700 = vmul.f32 %v674, %v689
        %v701 = vmul.f32 %v675, %v690
        %v702 = vsub.f32 %v698, %v700
        %v703 = vsub.f32 %v699, %v701
        %v704 = vadd.f32 %v702, %v703
        %v705 = vrot.slane %v704, 4
        %v706 = vadd.f32 %v704, %v705
        %v707 = vrot.slane %v706, 2
        %v708 = vadd.f32 %v706, %v707
        %v709 = vrot.slane %v708, 1
        %v710 = vadd.f32 %v708, %v709
        %v711 = vmul.f32 %v676, %v693
        %v712 = vadd.f32 %v710, %v711
        %s713 = scalar_lea.vmem %s636, %s691
        %714 = vst [vmem:[%s713] sm:$0x1] %v712
        %v715 = vmul.f32 %v666, %v697
        %v716 = vmul.f32 %v667, %v697
        %v717 = vmul.f32 %v668, %v687
        %v718 = vmul.f32 %v669, %v688
        %v719 = vmul.f32 %v670, %v689
        %v720 = vmul.f32 %v671, %v690
        %v721 = vsub.f32 %v717, %v719
        %v722 = vsub.f32 %v718, %v720
        %v723 = vadd.f32 %v715, %v721
        %v724 = vadd.f32 %v716, %v722
        %v725 = vmul.f32 %v668, %v689
        %v726 = vmul.f32 %v669, %v690
        %v727 = vmul.f32 %v670, %v687
        %v728 = vmul.f32 %v671, %v688
        %v729 = vadd.f32 %v725, %v727
        %v730 = vadd.f32 %v726, %v728
        %s731 = sadd.s32 %s691, 1
        %s732 = scalar_lea.vmem %s584, %s731
        %v733 = vld [vmem:[%s732] sm:$0x1]
        %v734 = vlaneseq
        %v735 = vshrl.u32 %v734, 7
        %v736 = vsub.s32 0, %v735
        %v737 = vrot.slane %v733, %v736
        %v738 = vmul.f32 %v672, %v723
        %v739 = vmul.f32 %v673, %v724
        %v740 = vmul.f32 %v674, %v729
        %v741 = vmul.f32 %v675, %v730
        %v742 = vsub.f32 %v738, %v740
        %v743 = vsub.f32 %v739, %v741
        %v744 = vadd.f32 %v742, %v743
        %v745 = vrot.slane %v744, 4
        %v746 = vadd.f32 %v744, %v745
        %v747 = vrot.slane %v746, 2
        %v748 = vadd.f32 %v746, %v747
        %v749 = vrot.slane %v748, 1
        %v750 = vadd.f32 %v748, %v749
        %v751 = vmul.f32 %v676, %v733
        %v752 = vadd.f32 %v750, %v751
        %s753 = scalar_lea.vmem %s636, %s731
        %754 = vst [vmem:[%s753] sm:$0x1] %v752
        %v755 = vmul.f32 %v666, %v737
        %v756 = vmul.f32 %v667, %v737
        %v757 = vmul.f32 %v668, %v723
        %v758 = vmul.f32 %v669, %v724
        %v759 = vmul.f32 %v670, %v729
        %v760 = vmul.f32 %v671, %v730
        %v761 = vsub.f32 %v757, %v759
        %v762 = vsub.f32 %v758, %v760
        %v763 = vadd.f32 %v755, %v761
        %v764 = vadd.f32 %v756, %v762
        %v765 = vmul.f32 %v668, %v729
        %v766 = vmul.f32 %v669, %v730
        %v767 = vmul.f32 %v670, %v723
        %v768 = vmul.f32 %v671, %v724
        %v769 = vadd.f32 %v765, %v767
        %v770 = vadd.f32 %v766, %v768
        %s771 = sadd.s32 %s691, 2
        %s772 = scalar_lea.vmem %s584, %s771
        %v773 = vld [vmem:[%s772] sm:$0x1]
        %v774 = vlaneseq
        %v775 = vshrl.u32 %v774, 7
        %v776 = vsub.s32 0, %v775
        %v777 = vrot.slane %v773, %v776
        %v778 = vmul.f32 %v672, %v763
        %v779 = vmul.f32 %v673, %v764
        %v780 = vmul.f32 %v674, %v769
        %v781 = vmul.f32 %v675, %v770
        %v782 = vsub.f32 %v778, %v780
        %v783 = vsub.f32 %v779, %v781
        %v784 = vadd.f32 %v782, %v783
        %v785 = vrot.slane %v784, 4
        %v786 = vadd.f32 %v784, %v785
        %v787 = vrot.slane %v786, 2
        %v788 = vadd.f32 %v786, %v787
        %v789 = vrot.slane %v788, 1
        %v790 = vadd.f32 %v788, %v789
        %v791 = vmul.f32 %v676, %v773
        %v792 = vadd.f32 %v790, %v791
        %s793 = scalar_lea.vmem %s636, %s771
        %794 = vst [vmem:[%s793] sm:$0x1] %v792
        %v795 = vmul.f32 %v666, %v777
        %v796 = vmul.f32 %v667, %v777
        %v797 = vmul.f32 %v668, %v763
        %v798 = vmul.f32 %v669, %v764
        %v799 = vmul.f32 %v670, %v769
        %v800 = vmul.f32 %v671, %v770
        %v801 = vsub.f32 %v797, %v799
        %v802 = vsub.f32 %v798, %v800
        %v803 = vadd.f32 %v795, %v801
        %v804 = vadd.f32 %v796, %v802
        %v805 = vmul.f32 %v668, %v769
        %v806 = vmul.f32 %v669, %v770
        %v807 = vmul.f32 %v670, %v763
        %v808 = vmul.f32 %v671, %v764
        %v809 = vadd.f32 %v805, %v807
        %v810 = vadd.f32 %v806, %v808
        %s811 = sadd.s32 %s691, 3
        %s812 = scalar_lea.vmem %s584, %s811
        %v813 = vld [vmem:[%s812] sm:$0x1]
        %v814 = vlaneseq
        %v815 = vshrl.u32 %v814, 7
        %v816 = vsub.s32 0, %v815
        %v817 = vrot.slane %v813, %v816
        %v818 = vmul.f32 %v672, %v803
        %v819 = vmul.f32 %v673, %v804
        %v820 = vmul.f32 %v674, %v809
        %v821 = vmul.f32 %v675, %v810
        %v822 = vsub.f32 %v818, %v820
        %v823 = vsub.f32 %v819, %v821
        %v824 = vadd.f32 %v822, %v823
        %v825 = vrot.slane %v824, 4
        %v826 = vadd.f32 %v824, %v825
        %v827 = vrot.slane %v826, 2
        %v828 = vadd.f32 %v826, %v827
        %v829 = vrot.slane %v828, 1
        %v830 = vadd.f32 %v828, %v829
        %v831 = vmul.f32 %v676, %v813
        %v832 = vadd.f32 %v830, %v831
        %s833 = scalar_lea.vmem %s636, %s811
        %834 = vst [vmem:[%s833] sm:$0x1] %v832
        %v835 = vmul.f32 %v666, %v817
        %v836 = vmul.f32 %v667, %v817
        %v837 = vmul.f32 %v668, %v803
        %v838 = vmul.f32 %v669, %v804
        %v839 = vmul.f32 %v670, %v809
        %v840 = vmul.f32 %v671, %v810
        %v841 = vsub.f32 %v837, %v839
        %v842 = vsub.f32 %v838, %v840
        %v843 = vadd.f32 %v835, %v841
        %v844 = vadd.f32 %v836, %v842
        %v845 = vmul.f32 %v668, %v809
        %v846 = vmul.f32 %v669, %v810
        %v847 = vmul.f32 %v670, %v803
        %v848 = vmul.f32 %v671, %v804
        %v849 = vadd.f32 %v845, %v847
        %v850 = vadd.f32 %v846, %v848
        %s851 = sadd.s32 %s691, 4
        %s852 = scalar_lea.vmem %s584, %s851
        %v853 = vld [vmem:[%s852] sm:$0x1]
        %v854 = vlaneseq
        %v855 = vshrl.u32 %v854, 7
        %v856 = vsub.s32 0, %v855
        %v857 = vrot.slane %v853, %v856
        %v858 = vmul.f32 %v672, %v843
        %v859 = vmul.f32 %v673, %v844
        %v860 = vmul.f32 %v674, %v849
        %v861 = vmul.f32 %v675, %v850
        %v862 = vsub.f32 %v858, %v860
        %v863 = vsub.f32 %v859, %v861
        %v864 = vadd.f32 %v862, %v863
        %v865 = vrot.slane %v864, 4
        %v866 = vadd.f32 %v864, %v865
        %v867 = vrot.slane %v866, 2
        %v868 = vadd.f32 %v866, %v867
        %v869 = vrot.slane %v868, 1
        %v870 = vadd.f32 %v868, %v869
        %v871 = vmul.f32 %v676, %v853
        %v872 = vadd.f32 %v870, %v871
        %s873 = scalar_lea.vmem %s636, %s851
        %874 = vst [vmem:[%s873] sm:$0x1] %v872
        %v875 = vmul.f32 %v666, %v857
        %v876 = vmul.f32 %v667, %v857
        %v877 = vmul.f32 %v668, %v843
        %v878 = vmul.f32 %v669, %v844
        %v879 = vmul.f32 %v670, %v849
        %v880 = vmul.f32 %v671, %v850
        %v881 = vsub.f32 %v877, %v879
        %v882 = vsub.f32 %v878, %v880
        %v883 = vadd.f32 %v875, %v881
        %v884 = vadd.f32 %v876, %v882
        %v885 = vmul.f32 %v668, %v849
        %v886 = vmul.f32 %v669, %v850
        %v887 = vmul.f32 %v670, %v843
        %v888 = vmul.f32 %v671, %v844
        %v889 = vadd.f32 %v885, %v887
        %v890 = vadd.f32 %v886, %v888
        %s891 = sadd.s32 %s691, 5
        %s892 = scalar_lea.vmem %s584, %s891
        %v893 = vld [vmem:[%s892] sm:$0x1]
        %v894 = vlaneseq
        %v895 = vshrl.u32 %v894, 7
        %v896 = vsub.s32 0, %v895
        %v897 = vrot.slane %v893, %v896
        %v898 = vmul.f32 %v672, %v883
        %v899 = vmul.f32 %v673, %v884
        %v900 = vmul.f32 %v674, %v889
        %v901 = vmul.f32 %v675, %v890
        %v902 = vsub.f32 %v898, %v900
        %v903 = vsub.f32 %v899, %v901
        %v904 = vadd.f32 %v902, %v903
        %v905 = vrot.slane %v904, 4
        %v906 = vadd.f32 %v904, %v905
        %v907 = vrot.slane %v906, 2
        %v908 = vadd.f32 %v906, %v907
        %v909 = vrot.slane %v908, 1
        %v910 = vadd.f32 %v908, %v909
        %v911 = vmul.f32 %v676, %v893
        %v912 = vadd.f32 %v910, %v911
        %s913 = scalar_lea.vmem %s636, %s891
        %914 = vst [vmem:[%s913] sm:$0x1] %v912
        %v915 = vmul.f32 %v666, %v897
        %v916 = vmul.f32 %v667, %v897
        %v917 = vmul.f32 %v668, %v883
        %v918 = vmul.f32 %v669, %v884
        %v919 = vmul.f32 %v670, %v889
        %v920 = vmul.f32 %v671, %v890
        %v921 = vsub.f32 %v917, %v919
        %v922 = vsub.f32 %v918, %v920
        %v923 = vadd.f32 %v915, %v921
        %v924 = vadd.f32 %v916, %v922
        %v925 = vmul.f32 %v668, %v889
        %v926 = vmul.f32 %v669, %v890
        %v927 = vmul.f32 %v670, %v883
        %v928 = vmul.f32 %v671, %v884
        %v929 = vadd.f32 %v925, %v927
        %v930 = vadd.f32 %v926, %v928
        %s931 = sadd.s32 %s691, 6
        %s932 = scalar_lea.vmem %s584, %s931
        %v933 = vld [vmem:[%s932] sm:$0x1]
        %v934 = vlaneseq
        %v935 = vshrl.u32 %v934, 7
        %v936 = vsub.s32 0, %v935
        %v937 = vrot.slane %v933, %v936
        %v938 = vmul.f32 %v672, %v923
        %v939 = vmul.f32 %v673, %v924
        %v940 = vmul.f32 %v674, %v929
        %v941 = vmul.f32 %v675, %v930
        %v942 = vsub.f32 %v938, %v940
        %v943 = vsub.f32 %v939, %v941
        %v944 = vadd.f32 %v942, %v943
        %v945 = vrot.slane %v944, 4
        %v946 = vadd.f32 %v944, %v945
        %v947 = vrot.slane %v946, 2
        %v948 = vadd.f32 %v946, %v947
        %v949 = vrot.slane %v948, 1
        %v950 = vadd.f32 %v948, %v949
        %v951 = vmul.f32 %v676, %v933
        %v952 = vadd.f32 %v950, %v951
        %s953 = scalar_lea.vmem %s636, %s931
        %954 = vst [vmem:[%s953] sm:$0x1] %v952
        %v955 = vmul.f32 %v666, %v937
        %v956 = vmul.f32 %v667, %v937
        %v957 = vmul.f32 %v668, %v923
        %v958 = vmul.f32 %v669, %v924
        %v959 = vmul.f32 %v670, %v929
        %v960 = vmul.f32 %v671, %v930
        %v961 = vsub.f32 %v957, %v959
        %v962 = vsub.f32 %v958, %v960
        %v963 = vadd.f32 %v955, %v961
        %v964 = vadd.f32 %v956, %v962
        %v965 = vmul.f32 %v668, %v929
        %v966 = vmul.f32 %v669, %v930
        %v967 = vmul.f32 %v670, %v923
        %v968 = vmul.f32 %v671, %v924
        %v969 = vadd.f32 %v965, %v967
        %v970 = vadd.f32 %v966, %v968
        %s971 = sadd.s32 %s691, 7
        %s972 = scalar_lea.vmem %s584, %s971
        %v973 = vld [vmem:[%s972] sm:$0x1]
        %v974 = vlaneseq
        %v975 = vshrl.u32 %v974, 7
        %v976 = vsub.s32 0, %v975
        %v977 = vrot.slane %v973, %v976
        %v978 = vmul.f32 %v672, %v963
        %v979 = vmul.f32 %v673, %v964
        %v980 = vmul.f32 %v674, %v969
        %v981 = vmul.f32 %v675, %v970
        %v982 = vsub.f32 %v978, %v980
        %v983 = vsub.f32 %v979, %v981
        %v984 = vadd.f32 %v982, %v983
        %v985 = vrot.slane %v984, 4
        %v986 = vadd.f32 %v984, %v985
        %v987 = vrot.slane %v986, 2
        %v988 = vadd.f32 %v986, %v987
        %v989 = vrot.slane %v988, 1
        %v990 = vadd.f32 %v988, %v989
        %v991 = vmul.f32 %v676, %v973
        %v992 = vadd.f32 %v990, %v991
        %s993 = scalar_lea.vmem %s636, %s971
        %994 = vst [vmem:[%s993] sm:$0x1] %v992
        %v995 = vmul.f32 %v666, %v977
        %v996 = vmul.f32 %v667, %v977
        %v997 = vmul.f32 %v668, %v963
        %v998 = vmul.f32 %v669, %v964
        %v999 = vmul.f32 %v670, %v969
        %v1000 = vmul.f32 %v671, %v970
        %v1001 = vsub.f32 %v997, %v999
        %v1002 = vsub.f32 %v998, %v1000
        %v1003 = vadd.f32 %v995, %v1001
        %v1004 = vadd.f32 %v996, %v1002
        %v1005 = vmul.f32 %v668, %v969
        %v1006 = vmul.f32 %v669, %v970
        %v1007 = vmul.f32 %v670, %v963
        %v1008 = vmul.f32 %v671, %v964
        %v1009 = vadd.f32 %v1005, %v1007
        %v1010 = vadd.f32 %v1006, %v1008
      $region65: #{multihead_complex_ema_forward.1} parent=55 // loop_footer
        %s686 = sadd.s32 1, %s682
      $region66: #{multihead_complex_ema_forward.1} parent=55 // loop_footer_branch
        %681 = sbr.rel target = $region62
      $region67: #{multihead_complex_ema_forward.1} parent=55 // loop_exit
        _
      %1011 = vst [vmem:[#allocation2] sm:$0xff] %v687
      %1012 = vst [vmem:[#allocation2 + $0x8] sm:$0xff] %v688
      %1013 = vst [vmem:[#allocation3] sm:$0xff] %v689
      %1014 = vst [vmem:[#allocation3 + $0x8] sm:$0xff] %v690
      // Predicated region
      $region68: #{multihead_complex_ema_forward.1} parent=55 // pred_check
        %p1015 = pneg %p654
      $region69: #{multihead_complex_ema_forward.1} parent=55 // pred_check_branch
        %1017 = sbr.rel (%p1015) target = $region71
      $region70: #{multihead_complex_ema_forward.1} parent=55 // pred_region
        %1018 = vst [vmem:[%s645] sm:$0xff] %v687
        %1019 = vst [vmem:[%s645 + $0x8] sm:$0xff] %v688
        %1020 = vst [vmem:[%s653] sm:$0xff] %v689
        %1021 = vst [vmem:[%s653 + $0x8] sm:$0xff] %v690
      $region71: #{multihead_complex_ema_forward.1} parent=55 // pred_fallthru
        _
      %s1022 = smul.u32 2, %s30
      %p1023 = scmp.lt.s32.totalorder %s29, 1
      %s1024 = scalar_select %p1023, %s29, 1
      %p1025 = scmp.lt.s32.totalorder %s1022, 1
      %s1026 = scalar_select %p1025, %s1022, 1
      %p1027 = scmp.lt.s32.totalorder %s28, 0
      %s1028 = scalar_select %p1027, %s28, 0
      %s1029 = sadd.s32 %s1028, %s1026
      %s1030 = smul.addr %s1024, 2
      %s1031 = sadd.s32 %s1029, %s1030
      %s1032 = smul.addr %s1031, 8
      %s1033 = scalar_lea.vmem %s9, %s1032
      %p1034 = scmp.lt.s32.totalorder %s29, 1
      %s1035 = scalar_select %p1034, %s29, 1
      %p1036 = scmp.lt.s32.totalorder %s28, 0
      %s1037 = scalar_select %p1036, %s28, 0
      %s1038 = smul.addr %s1035, 2
      %s1039 = sadd.s32 %s1037, %s1038
      %s1040 = smul.addr %s1039, 8
      %s1041 = scalar_lea.vmem %s10, %s1040
      %p1042 = scmp.lt.s32.totalorder %s29, 1
      %s1043 = scalar_select %p1042, %s29, 1
      %p1044 = scmp.lt.s32.totalorder %s28, 0
      %s1045 = scalar_select %p1044, %s28, 0
      %s1046 = smul.addr %s1043, 2
      %s1047 = sadd.s32 %s1045, %s1046
      %s1048 = smul.addr %s1047, 8
      %s1049 = scalar_lea.vmem %s11, %s1048
      // Predicated region
      $region72: #{multihead_complex_ema_forward.1} parent=55 // pred_check
        %p1050 = pneg %p306
      $region73: #{multihead_complex_ema_forward.1} parent=55 // pred_check_branch
        %1052 = sbr.rel (%p1050) target = $region75
      $region74: #{multihead_complex_ema_forward.1} parent=55 // pred_region
        %s1053 = smul.u32 2, %s30
      $region75: #{multihead_complex_ema_forward.1} parent=55 // pred_fallthru
        _
      // Predicated region
      $region76: #{multihead_complex_ema_forward.1} parent=55 // pred_check
        %p1054 = pneg %p334
      $region77: #{multihead_complex_ema_forward.1} parent=55 // pred_check_branch
        %1056 = sbr.rel (%p1054) target = $region79
      $region78: #{multihead_complex_ema_forward.1} parent=55 // pred_region
        _
      $region79: #{multihead_complex_ema_forward.1} parent=55 // pred_fallthru
        _
      // Predicated region
      $region80: #{multihead_complex_ema_forward.1} parent=55 // pred_check
        %p1057 = pneg %p362
      $region81: #{multihead_complex_ema_forward.1} parent=55 // pred_check_branch
        %1059 = sbr.rel (%p1057) target = $region83
      $region82: #{multihead_complex_ema_forward.1} parent=55 // pred_region
        _
      $region83: #{multihead_complex_ema_forward.1} parent=55 // pred_fallthru
        _
    $region56: #{multihead_complex_ema_forward.1} parent=5 // pred_fallthru
      _
    %p1060 = scmp.le.s32.totalorder 2, %s18
    // Predicated region
    $region84: #{multihead_complex_ema_forward.1} parent=5 // pred_check
      %p1061 = pneg %p1060
    $region85: #{multihead_complex_ema_forward.1} parent=5 // pred_check_branch
      %1063 = sbr.rel (%p1061) target = $region87
    $region86: #{multihead_complex_ema_forward.1} parent=5 // pred_region
      %s1064 = ssub.s32 %s18, 2
      // Predicated region
      $region88: #{multihead_complex_ema_forward.1} parent=86 // pred_check
        %p1065 = pneg %p312
      $region89: #{multihead_complex_ema_forward.1} parent=86 // pred_check_branch
        %1067 = sbr.rel (%p1065) target = $region91
      $region90: #{multihead_complex_ema_forward.1} parent=86 // pred_region
        %s1068 = smul.u32 2, %s33
        %p1069 = scmp.lt.s32.totalorder %s32, 1
        %s1070 = scalar_select %p1069, %s32, 1
        %p1071 = scmp.lt.s32.totalorder %s1068, 1
        %s1072 = scalar_select %p1071, %s1068, 1
        %p1073 = scmp.lt.s32.totalorder %s31, 0
        %s1074 = scalar_select %p1073, %s31, 0
        %s1075 = sadd.s32 %s1074, %s1072
        %s1076 = smul.addr %s1070, 2
        %s1077 = sadd.s32 %s1075, %s1076
        %s1078 = smul.addr %s1077, 8
        %s1079 = scalar_lea.vmem %s9, %s1078
      $region91: #{multihead_complex_ema_forward.1} parent=86 // pred_fallthru
        _
      // Predicated region
      $region92: #{multihead_complex_ema_forward.1} parent=86 // pred_check
        %p1080 = pneg %p340
      $region93: #{multihead_complex_ema_forward.1} parent=86 // pred_check_branch
        %1082 = sbr.rel (%p1080) target = $region95
      $region94: #{multihead_complex_ema_forward.1} parent=86 // pred_region
        %p1083 = scmp.lt.s32.totalorder %s32, 1
        %s1084 = scalar_select %p1083, %s32, 1
        %p1085 = scmp.lt.s32.totalorder %s31, 0
        %s1086 = scalar_select %p1085, %s31, 0
        %s1087 = smul.addr %s1084, 2
        %s1088 = sadd.s32 %s1086, %s1087
        %s1089 = smul.addr %s1088, 8
        %s1090 = scalar_lea.vmem %s10, %s1089
      $region95: #{multihead_complex_ema_forward.1} parent=86 // pred_fallthru
        _
      // Predicated region
      $region96: #{multihead_complex_ema_forward.1} parent=86 // pred_check
        %p1091 = pneg %p368
      $region97: #{multihead_complex_ema_forward.1} parent=86 // pred_check_branch
        %1093 = sbr.rel (%p1091) target = $region99
      $region98: #{multihead_complex_ema_forward.1} parent=86 // pred_region
        %p1094 = scmp.lt.s32.totalorder %s32, 1
        %s1095 = scalar_select %p1094, %s32, 1
        %p1096 = scmp.lt.s32.totalorder %s31, 0
        %s1097 = scalar_select %p1096, %s31, 0
        %s1098 = smul.addr %s1095, 2
        %s1099 = sadd.s32 %s1097, %s1098
        %s1100 = smul.addr %s1099, 8
        %s1101 = scalar_lea.vmem %s11, %s1100
      $region99: #{multihead_complex_ema_forward.1} parent=86 // pred_fallthru
        _
    $region87: #{multihead_complex_ema_forward.1} parent=5 // pred_fallthru
      _
  $region6: #{multihead_complex_ema_forward.1} parent=0 // loop_footer
    %s22 = sadd.s32 1, %s18
  $region7: #{multihead_complex_ema_forward.1} parent=0 // loop_footer_branch
    %17 = sbr.rel target = $region3
  $region8: #{multihead_complex_ema_forward.1} parent=0 // loop_exit
    _

</llo_original>
